<compile_context>
chip_gen: v6e
topology: v6e:2x2x1
jax: 0.10.0
libtpu: 0.0.40
codegen_flags: <defaults>
</compile_context>

<pallas_src>
import jax
import jax.numpy as jnp
from jax import lax
from jax.experimental import pallas as pl
from jax.experimental.pallas import tpu as pltpu


BIG = 1e30          # "infinite" distance for cross-batch / already-used pairs
CLAMP_MIN = 1e-16   # torch_geometric clamp on squared distance
BN_EPS = 1e-5
LANE = 128
SUBLANE = 8


def _pad_to(n: int, m: int) -> int:
    return ((n + m - 1) // m) * m


def _vmem_limit_bytes() -> int:
    """Per-generation scoped-VMEM budget (v5e/v6e: 128 MiB phys, v7x: 64 MiB)."""
    try:
        cap = int(pltpu.get_tpu_info().vmem_capacity_bytes)
    except Exception:
        cap = 64 * 1024 * 1024
    return min((cap * 3) // 4, 112 * 1024 * 1024)


def _recip(x):
    """EUP approximate reciprocal + one Newton step: no VPU divide, f32 accuracy."""
    r = pl.reciprocal(x, approx=True)
    return r * (2.0 - x * r)


def _row_mask(mt: int, m_total: int):
    """1.0 for rows that are real fine points, 0.0 for padded rows of this tile."""
    row0 = pl.program_id(0) * mt
    rows = lax.broadcasted_iota(jnp.int32, (mt, 1), 0) + row0
    return (rows < m_total).astype(jnp.float32)


# ---------------- kernel A: knn_interpolate + first Linear + ReLU + stats ----
def _make_interp_lin1_kernel(k: int, m_total: int):
    def kernel(x_ref, pos_t_ref, bat_ref, xskip_ref, pskip_ref, bskip_ref,
               w1a_ref, w1b_ref, b1_ref, out_ref, stats_ref):
        ps = pskip_ref[...]            # [Mt, 3]   fine positions (tile)
        pos_t = pos_t_ref[...]         # [3, Np]   coarse positions (transposed)
        bat = bat_ref[...]             # [1, Np]   int32 coarse batch ids
        bs = bskip_ref[...]            # [Mt, 1]   int32 fine batch ids

        mt = ps.shape[0]
        np_ = pos_t.shape[1]

        # Pairwise squared distances via per-coordinate VPU expansion.
        # (kept off the MXU on purpose: |a|^2+|b|^2-2ab cancellation is unsafe
        #  next to the 1/clamp(d^2, 1e-16) weighting)
        d2 = jnp.zeros((mt, np_), jnp.float32)
        for c in range(3):
            diff = ps[:, c:c + 1] - pos_t[c:c + 1, :]        # [Mt, Np]
            d2 = d2 + diff * diff

        # Cross-batch pairs (incl. padded rows/cols) -> infinite distance.
        d2 = jnp.where(bs == bat, d2, jnp.float32(BIG))

        # One cross-lane reduce per k step; den is recovered with a single
        # post-loop lane-sum of w_acc (exact ties may take >1 k slot).
        def knn_step(carry):
            w_acc, d_work = carry
            min_d = jnp.min(d_work, axis=1, keepdims=True)                # [Mt,1]
            sel = d_work == min_d                                         # [Mt,Np]
            valid = (min_d < jnp.float32(BIG)).astype(jnp.float32)
            w = valid * _recip(jnp.maximum(min_d, jnp.float32(CLAMP_MIN)))
            w_acc = w_acc + jnp.where(sel, w, 0.0)
            d_work = jnp.where(sel, jnp.float32(BIG), d_work)
            return w_acc, d_work

        carry = (jnp.zeros((mt, np_), jnp.float32), d2)
        if k <= 4:                     # small k: static unroll is cheapest
            for _ in range(k):
                carry = knn_step(carry)
        else:                          # large k: bounded live ranges, unrolled
            carry = lax.fori_loop(0, k, lambda _, c: knn_step(c), carry,
                                  unroll=True)
        w_acc, _ = carry

        den = jnp.sum(w_acc, axis=1, keepdims=True)                       # [Mt,1]
        # Single one-hot-weight gather matmul replaces k separate gathers.
        num = jnp.dot(w_acc, x_ref[...], preferred_element_type=jnp.float32)
        interp = num * _recip(jnp.maximum(den, jnp.float32(CLAMP_MIN)))   # [Mt,Cin]

        # First Linear, split (interp | x_skip) -> no lane-axis concat.
        h = (jnp.dot(interp, w1a_ref[...], preferred_element_type=jnp.float32)
             + jnp.dot(xskip_ref[...], w1b_ref[...],
                       preferred_element_type=jnp.float32)
             + b1_ref[...])
        h = jnp.maximum(h, 0.0)

        # Mask padded rows, write the activation tile and per-tile BN partials.
        mask = _row_mask(mt, m_total)
        hm = h * mask
        out_ref[...] = hm
        s = jnp.sum(hm, axis=0, keepdims=True)                            # [1,C]
        ss = jnp.sum(hm * hm, axis=0, keepdims=True)                      # [1,C]
        stats_ref[...] = jnp.concatenate([s, ss], axis=0)[None]           # [1,2,C]

    return kernel


# ---------- mid kernel: (BN-folded) Linear -> ReLU -> per-tile BN stats ------
def _make_lin_relu_stats_kernel(m_total: int):
    def kernel(h_ref, w_ref, b_ref, out_ref, stats_ref):
        h = jnp.dot(h_ref[...], w_ref[...],
                    preferred_element_type=jnp.float32) + b_ref[...]
        h = jnp.maximum(h, 0.0)
        mt = h.shape[0]
        mask = _row_mask(mt, m_total)
        hm = h * mask
        out_ref[...] = hm
        s = jnp.sum(hm, axis=0, keepdims=True)
        ss = jnp.sum(hm * hm, axis=0, keepdims=True)
        stats_ref[...] = jnp.concatenate([s, ss], axis=0)[None]

    return kernel


# ------------------ final kernel: apply last BatchNorm (h*a + c) -------------
def _bn_apply_kernel(h_ref, a_ref, c_ref, out_ref):
    out_ref[...] = h_ref[...] * a_ref[...] + c_ref[...]


# --------------------------------- helpers -----------------------------------
def _choose_tiling(M, n_pad, cin_pad, cskip_pad, h0_pad, tile_m_req, vmem_limit):
    """Pick (tile_m, grid_m, m_pad): VMEM-bounded tile, even tile count (v7x)."""
    # Resident (constant index_map) f32 blocks of kernel A, x2 for double buffers.
    resident = 4 * (n_pad * cin_pad + 4 * n_pad
                    + (cin_pad + cskip_pad + 1) * h0_pad)
    # Per fine-point-row f32 bytes: ~4 live [*, n_pad] temporaries in the knn
    # loop + double-buffered streamed tiles + the interp/h temporaries.
    per_row = 4 * (4 * n_pad + 2 * (cskip_pad + 4 + h0_pad) + cin_pad)
    budget = max(vmem_limit - 2 * resident, vmem_limit // 8)
    cap = max(SUBLANE, (budget // per_row) // SUBLANE * SUBLANE)
    tile_m = max(SUBLANE, min((tile_m_req // SUBLANE) * SUBLANE, cap))
    grid_m = -(-M // tile_m)
    if grid_m > 1 and grid_m % 2:
        grid_m += 1                    # even tile count -> both v7x TCs busy
    tile_m = _pad_to(-(-M // grid_m), SUBLANE)
    m_pad = tile_m * grid_m
    return tile_m, grid_m, m_pad


def _bn_affine_from_stats(stats, gamma, beta, m_total, pad_w, width):
    """Reduce per-tile (sum, sumsq) -> per-channel BN scale/shift (a, c)."""
    s = jnp.sum(stats[:, 0, :], axis=0)                    # [pad_w]
    ss = jnp.sum(stats[:, 1, :], axis=0)
    mu = s / m_total
    var = jnp.maximum(ss / m_total - mu * mu, 0.0)          # biased variance
    g_p = jnp.zeros((pad_w,), jnp.float32).at[:width].set(
        jnp.asarray(gamma, jnp.float32))
    b_p = jnp.zeros((pad_w,), jnp.float32).at[:width].set(
        jnp.asarray(beta, jnp.float32))
    a = g_p * lax.rsqrt(var + jnp.float32(BN_EPS))
    c = b_p - mu * a
    return a, c


def fp_module_forward(x, pos, batch, x_skip, pos_skip, batch_skip, params,
                      k: int, tile_m: int = 512):
    """Pallas implementation of FPModule.forward.

    Returns (x_out, pos_skip, batch_skip) like the PyTorch module.
    params: list of (W[out,in], b[out], gamma[out], beta[out]) per MLP layer.
    """
    x = jnp.asarray(x, jnp.float32)
    pos = jnp.asarray(pos, jnp.float32)
    x_skip = jnp.asarray(x_skip, jnp.float32)
    pos_skip = jnp.asarray(pos_skip, jnp.float32)
    batch = jnp.asarray(batch, jnp.int32)
    batch_skip = jnp.asarray(batch_skip, jnp.int32)

    N, c_in = x.shape
    M, c_skip = x_skip.shape
    n_layers = len(params)
    widths = [int(p[0].shape[0]) for p in params]

    # Lane padding (128) for all channel dims; coarse N padded too so the
    # [tile_M, N] distance / gather matrices are lane-dense.
    n_pad = _pad_to(N, LANE)
    cin_pad = _pad_to(c_in, LANE)
    cskip_pad = _pad_to(c_skip, LANE)
    h_pad = [_pad_to(w, LANE) for w in widths]

    vmem_limit = _vmem_limit_bytes()
    tile_m, grid_m, m_pad = _choose_tiling(
        M, n_pad, cin_pad, cskip_pad, h_pad[0], tile_m, vmem_limit)

    # ---- coarse-side (resident) padded arrays; pad coarse batch = -2
    x_p = jnp.zeros((n_pad, cin_pad), jnp.float32).at[:N, :c_in].set(x)
    pos_t_p = jnp.zeros((3, n_pad), jnp.float32).at[:, :N].set(pos.T)
    bat_p = jnp.full((1, n_pad), -2, jnp.int32).at[:, :N].set(batch[None, :])

    # ---- fine-side (M-tiled) padded arrays; pad fine batch = -1 (never matches)
    xs_p = jnp.zeros((m_pad, cskip_pad), jnp.float32).at[:M, :c_skip].set(x_skip)
    ps_p = jnp.zeros((m_pad, 3), jnp.float32).at[:M].set(pos_skip)
    bs_p = jnp.full((m_pad, 1), -1, jnp.int32).at[:M, 0].set(batch_skip)

    # ---- layer-1 weights: split into interp / skip halves, transpose, pad
    W1, b1, _, _ = params[0]
    W1 = jnp.asarray(W1, jnp.float32)
    w1a = jnp.zeros((cin_pad, h_pad[0]), jnp.float32).at[
        :c_in, :widths[0]].set(W1[:, :c_in].T)
    w1b = jnp.zeros((cskip_pad, h_pad[0]), jnp.float32).at[
        :c_skip, :widths[0]].set(W1[:, c_in:].T)
    b1_p = jnp.zeros((1, h_pad[0]), jnp.float32).at[0, :widths[0]].set(
        jnp.asarray(b1, jnp.float32))

    cparams = pltpu.CompilerParams(dimension_semantics=("parallel",),
                                   vmem_limit_bytes=vmem_limit)

    def _res(i):          # resident block (same block every grid step)
        return (0, 0)

    def _tile(i):         # M-tiled block
        return (i, 0)

    def _stat(i):         # per-tile stats block
        return (i, 0, 0)

    # ------------- kernel A: knn_interpolate + Lin1 + ReLU + BN1 partials ----
    h_cur, stats = pl.pallas_call(
        _make_interp_lin1_kernel(k, M),
        grid=(grid_m,),
        in_specs=[
            pl.BlockSpec((n_pad, cin_pad), _res),       # x (coarse features)
            pl.BlockSpec((3, n_pad), _res),             # pos^T (coarse)
            pl.BlockSpec((1, n_pad), _res),             # batch (coarse)
            pl.BlockSpec((tile_m, cskip_pad), _tile),   # x_skip tile
            pl.BlockSpec((tile_m, 3), _tile),           # pos_skip tile
            pl.BlockSpec((tile_m, 1), _tile),           # batch_skip tile
            pl.BlockSpec((cin_pad, h_pad[0]), _res),    # W1a (interp half)
            pl.BlockSpec((cskip_pad, h_pad[0]), _res),  # W1b (skip half)
            pl.BlockSpec((1, h_pad[0]), _res),          # b1
        ],
        out_specs=(
            pl.BlockSpec((tile_m, h_pad[0]), _tile),
            pl.BlockSpec((1, 2, h_pad[0]), _stat),
        ),
        out_shape=(
            jax.ShapeDtypeStruct((m_pad, h_pad[0]), jnp.float32),
            jax.ShapeDtypeStruct((grid_m, 2, h_pad[0]), jnp.float32),
        ),
        compiler_params=cparams,
    )(x_p, pos_t_p, bat_p, xs_p, ps_p, bs_p, w1a, w1b, b1_p)

    # ------------- remaining layers: fold BN_i into Lin_{i+1}, tiled over M ---
    for li in range(n_layers):
        _, _, gamma, beta = params[li]
        a_vec, c_vec = _bn_affine_from_stats(stats, gamma, beta, M,
                                             h_pad[li], widths[li])
        if li + 1 < n_layers:
            W_next = jnp.asarray(params[li + 1][0], jnp.float32)   # [cout, cin]
            b_next = jnp.asarray(params[li + 1][1], jnp.float32)
            cin_l, cout_l = widths[li], widths[li + 1]
            # Fold BN_li (scale a, shift c) into the next Linear (tiny arrays).
            w_fold = W_next.T * a_vec[:cin_l, None]                # [cin, cout]
            b_fold = b_next + c_vec[:cin_l] @ W_next.T             # [cout]
            w_p = jnp.zeros((h_pad[li], h_pad[li + 1]), jnp.float32).at[
                :cin_l, :cout_l].set(w_fold)
            b_p = jnp.zeros((1, h_pad[li + 1]), jnp.float32).at[
                0, :cout_l].set(b_fold)

            h_cur, stats = pl.pallas_call(
                _make_lin_relu_stats_kernel(M),
                grid=(grid_m,),
                in_specs=[
                    pl.BlockSpec((tile_m, h_pad[li]), _tile),
                    pl.BlockSpec((h_pad[li], h_pad[li + 1]), _res),
                    pl.BlockSpec((1, h_pad[li + 1]), _res),
                ],
                out_specs=(
                    pl.BlockSpec((tile_m, h_pad[li + 1]), _tile),
                    pl.BlockSpec((1, 2, h_pad[li + 1]), _stat),
                ),
                out_shape=(
                    jax.ShapeDtypeStruct((m_pad, h_pad[li + 1]), jnp.float32),
                    jax.ShapeDtypeStruct((grid_m, 2, h_pad[li + 1]), jnp.float32),
                ),
                compiler_params=cparams,
            )(h_cur, w_p, b_p)
        else:
            # Last layer: apply its BatchNorm (elementwise a*h + c), tiled.
            a_p = a_vec[None, :]
            c_p = c_vec[None, :]
            out_pad = pl.pallas_call(
                _bn_apply_kernel,
                grid=(grid_m,),
                in_specs=[
                    pl.BlockSpec((tile_m, h_pad[li]), _tile),
                    pl.BlockSpec((1, h_pad[li]), _res),
                    pl.BlockSpec((1, h_pad[li]), _res),
                ],
                out_specs=pl.BlockSpec((tile_m, h_pad[li]), _tile),
                out_shape=jax.ShapeDtypeStruct((m_pad, h_pad[li]), jnp.float32),
                compiler_params=cparams,
            )(h_cur, a_p, c_p)

    x_out = out_pad[:M, :widths[-1]]
    return x_out, pos_skip, batch_skip


# --------------------------- pure-JAX reference ----------------------------
def _ref_forward(x, pos, batch, x_skip, pos_skip, batch_skip, params, k):
    diff = pos_skip[:, None, :] - pos[None, :, :]
    d2 = jnp.sum(diff * diff, axis=-1)
    same = batch_skip[:, None] == batch[None, :]
    d2 = jnp.where(same, d2, BIG)
    neg_d, idx = lax.top_k(-d2, k)                    # [M, k]
    dk = -neg_d
    w = jnp.where(dk < BIG, 1.0 / jnp.maximum(dk, CLAMP_MIN), 0.0)
    feats = x[idx]                                    # [M, k, Cin]
    interp = jnp.sum(w[..., None] * feats, axis=1) / jnp.maximum(
        jnp.sum(w, axis=1, keepdims=True), CLAMP_MIN)
    h = jnp.concatenate([interp, x_skip], axis=1)
    for (W, b, g, be) in params:
        h = h @ W.T + b
        h = jnp.maximum(h, 0.0)
        mu = h.mean(0, keepdims=True)
        var = ((h - mu) ** 2).mean(0, keepdims=True)
        h = (h - mu) / jnp.sqrt(var + BN_EPS) * g + be
    return h


# ----------------------------------- main ----------------------------------
if __name__ == "__main__":
    key = jax.random.PRNGKey(0)
    N, M = 16, 32           # coarse points, fine (skip) points
    C_IN, C_SKIP = 16, 8    # feature channels
    K = 3                   # knn_interpolate k
    mlp_channels = [C_IN + C_SKIP, 32, 32]   # FPModule nn = MLP([24, 32, 32])

    keys = jax.random.split(key, 16)
    x = jax.random.normal(keys[0], (N, C_IN), jnp.float32)
    pos = jax.random.uniform(keys[1], (N, 3), jnp.float32)
    x_skip = jax.random.normal(keys[2], (M, C_SKIP), jnp.float32)
    pos_skip = jax.random.uniform(keys[3], (M, 3), jnp.float32)
    batch = jnp.concatenate([jnp.zeros(N // 2, jnp.int32),
                             jnp.ones(N - N // 2, jnp.int32)])
    batch_skip = jnp.concatenate([jnp.zeros(M // 2, jnp.int32),
                                  jnp.ones(M - M // 2, jnp.int32)])

    # Deterministic parameter init (PyTorch Linear default-like + affine BN).
    params = []
    kp = keys[4]
    for li in range(1, len(mlp_channels)):
        cin, cout = mlp_channels[li - 1], mlp_channels[li]
        kp, k1, k2, k3, k4 = jax.random.split(kp, 5)
        bound = 1.0 / jnp.sqrt(cin)
        W = jax.random.uniform(k1, (cout, cin), jnp.float32, -bound, bound)
        b = jax.random.uniform(k2, (cout,), jnp.float32, -bound, bound)
        gamma = 1.0 + 0.1 * jax.random.normal(k3, (cout,), jnp.float32)
        beta = 0.1 * jax.random.normal(k4, (cout,), jnp.float32)
        params.append((W, b, gamma, beta))

    x_out, pos_out, batch_out = fp_module_forward(
        x, pos, batch, x_skip, pos_skip, batch_skip, params, K, tile_m=16)
    jax.block_until_ready(x_out)

    ref = _ref_forward(x, pos, batch, x_skip, pos_skip, batch_skip, params, K)
    assert x_out.shape == (M, mlp_channels[-1])
    assert jnp.all(jnp.isfinite(x_out))
    assert jnp.allclose(x_out, ref, atol=1e-3, rtol=1e-3)

    print("KERNEL_OK")
</pallas_src>

<mosaic_0001>
module attributes {stable_mosaic.version = 11 : i64} {
  func.func @kernel(%arg0: i32, %arg1: memref<128x128xf32, #tpu.memory_space<vmem>>, %arg2: memref<3x128xf32, #tpu.memory_space<vmem>>, %arg3: memref<1x128xi32, #tpu.memory_space<vmem>>, %arg4: memref<16x128xf32, #tpu.memory_space<vmem>>, %arg5: memref<16x3xf32, #tpu.memory_space<vmem>>, %arg6: memref<16x1xi32, #tpu.memory_space<vmem>>, %arg7: memref<128x128xf32, #tpu.memory_space<vmem>>, %arg8: memref<128x128xf32, #tpu.memory_space<vmem>>, %arg9: memref<1x128xf32, #tpu.memory_space<vmem>>, %arg10: memref<16x128xf32, #tpu.memory_space<vmem>>, %arg11: memref<1x2x128xf32, #tpu.memory_space<vmem>>) attributes {dimension_semantics = [#tpu.dimension_semantics<parallel>], iteration_bounds = array<i64: 2>, scalar_prefetch = 0 : i64, scratch_operands = 0 : i64, tpu.core_type = #tpu.core_type<tc>, window_params = [{pipeline_mode = #tpu.pipeline_mode<synchronous>, transform_indices = @transform_0, window_bounds = array<i64: 128, 128>}, {pipeline_mode = #tpu.pipeline_mode<synchronous>, transform_indices = @transform_1, window_bounds = array<i64: 3, 128>}, {pipeline_mode = #tpu.pipeline_mode<synchronous>, transform_indices = @transform_2, window_bounds = array<i64: 1, 128>}, {transform_indices = @transform_3, window_bounds = array<i64: 16, 128>}, {transform_indices = @transform_4, window_bounds = array<i64: 16, 3>}, {transform_indices = @transform_5, window_bounds = array<i64: 16, 1>}, {pipeline_mode = #tpu.pipeline_mode<synchronous>, transform_indices = @transform_6, window_bounds = array<i64: 128, 128>}, {pipeline_mode = #tpu.pipeline_mode<synchronous>, transform_indices = @transform_7, window_bounds = array<i64: 128, 128>}, {pipeline_mode = #tpu.pipeline_mode<synchronous>, transform_indices = @transform_8, window_bounds = array<i64: 1, 128>}, {transform_indices = @transform_9, window_bounds = array<i64: 16, 128>}, {transform_indices = @transform_10, window_bounds = array<i64: 1, 2, 128>}]} {
    %c0 = arith.constant 0 : index
    %c0_0 = arith.constant 0 : index
    %0 = vector.load %arg5[%c0, %c0_0] : memref<16x3xf32, #tpu.memory_space<vmem>>, vector<16x3xf32>
    %c0_1 = arith.constant 0 : index
    %c0_2 = arith.constant 0 : index
    %1 = vector.load %arg2[%c0_1, %c0_2] : memref<3x128xf32, #tpu.memory_space<vmem>>, vector<3x128xf32>
    %c0_3 = arith.constant 0 : index
    %c0_4 = arith.constant 0 : index
    %2 = vector.load %arg3[%c0_3, %c0_4] : memref<1x128xi32, #tpu.memory_space<vmem>>, vector<1x128xi32>
    %c0_5 = arith.constant 0 : index
    %c0_6 = arith.constant 0 : index
    %3 = vector.load %arg6[%c0_5, %c0_6] : memref<16x1xi32, #tpu.memory_space<vmem>>, vector<16x1xi32>
    %cst = arith.constant 0.000000e+00 : f32
    %4 = vector.broadcast %cst : f32 to vector<16x128xf32>
    %5 = vector.extract_strided_slice %0 {offsets = [0, 0], sizes = [16, 1], strides = [1, 1]} : vector<16x3xf32> to vector<16x1xf32>
    %6 = vector.extract_strided_slice %1 {offsets = [0, 0], sizes = [1, 128], strides = [1, 1]} : vector<3x128xf32> to vector<1x128xf32>
    %7 = vector.broadcast %5 : vector<16x1xf32> to vector<16x128xf32>
    %8 = vector.broadcast %6 : vector<1x128xf32> to vector<16x128xf32>
    %9 = arith.subf %7, %8 : vector<16x128xf32>
    %10 = arith.mulf %9, %9 : vector<16x128xf32>
    %11 = arith.addf %4, %10 : vector<16x128xf32>
    %12 = vector.extract_strided_slice %0 {offsets = [0, 1], sizes = [16, 1], strides = [1, 1]} : vector<16x3xf32> to vector<16x1xf32>
    %13 = vector.extract_strided_slice %1 {offsets = [1, 0], sizes = [1, 128], strides = [1, 1]} : vector<3x128xf32> to vector<1x128xf32>
    %14 = vector.broadcast %12 : vector<16x1xf32> to vector<16x128xf32>
    %15 = vector.broadcast %13 : vector<1x128xf32> to vector<16x128xf32>
    %16 = arith.subf %14, %15 : vector<16x128xf32>
    %17 = arith.mulf %16, %16 : vector<16x128xf32>
    %18 = arith.addf %11, %17 : vector<16x128xf32>
    %19 = vector.extract_strided_slice %0 {offsets = [0, 2], sizes = [16, 1], strides = [1, 1]} : vector<16x3xf32> to vector<16x1xf32>
    %20 = vector.extract_strided_slice %1 {offsets = [2, 0], sizes = [1, 128], strides = [1, 1]} : vector<3x128xf32> to vector<1x128xf32>
    %21 = vector.broadcast %19 : vector<16x1xf32> to vector<16x128xf32>
    %22 = vector.broadcast %20 : vector<1x128xf32> to vector<16x128xf32>
    %23 = arith.subf %21, %22 : vector<16x128xf32>
    %24 = arith.mulf %23, %23 : vector<16x128xf32>
    %25 = arith.addf %18, %24 : vector<16x128xf32>
    %26 = vector.broadcast %3 : vector<16x1xi32> to vector<16x128xi32>
    %27 = vector.broadcast %2 : vector<1x128xi32> to vector<16x128xi32>
    %28 = arith.cmpi eq, %26, %27 : vector<16x128xi32>
    %cst_7 = arith.constant 1.000000e+30 : f32
    %29 = vector.broadcast %cst_7 : f32 to vector<16x128xf32>
    %30 = arith.select %28, %25, %29 : vector<16x128xi1>, vector<16x128xf32>
    %cst_8 = arith.constant 0.000000e+00 : f32
    %31 = vector.broadcast %cst_8 : f32 to vector<16x128xf32>
    %cst_9 = arith.constant dense<0x7F800000> : vector<16xf32>
    %32 = vector.multi_reduction <minimumf>, %30, %cst_9 [1] : vector<16x128xf32> to vector<16xf32>
    %33 = vector.shape_cast %32 : vector<16xf32> to vector<16x1xf32>
    %34 = vector.broadcast %33 : vector<16x1xf32> to vector<16x128xf32>
    %35 = arith.cmpf oeq, %30, %34 : vector<16x128xf32>
    %cst_10 = arith.constant 1.000000e+30 : f32
    %36 = vector.broadcast %cst_10 : f32 to vector<16x1xf32>
    %37 = arith.cmpf olt, %33, %36 : vector<16x1xf32>
    %38 = arith.extui %37 : vector<16x1xi1> to vector<16x1xi32>
    %39 = arith.sitofp %38 : vector<16x1xi32> to vector<16x1xf32>
    %cst_11 = arith.constant 1.000000e-16 : f32
    %40 = vector.broadcast %cst_11 : f32 to vector<16x1xf32>
    %41 = arith.maximumf %33, %40 : vector<16x1xf32>
    %42 = tpu.reciprocal %41 {approx = true} : vector<16x1xf32> -> vector<16x1xf32>
    %43 = arith.mulf %41, %42 : vector<16x1xf32>
    %cst_12 = arith.constant 2.000000e+00 : f32
    %44 = vector.broadcast %cst_12 : f32 to vector<16x1xf32>
    %45 = arith.subf %44, %43 : vector<16x1xf32>
    %46 = arith.mulf %42, %45 : vector<16x1xf32>
    %47 = arith.mulf %39, %46 : vector<16x1xf32>
    %cst_13 = arith.constant 0.000000e+00 : f32
    %48 = vector.shape_cast %47 : vector<16x1xf32> to vector<16x1xf32>
    %49 = vector.broadcast %48 : vector<16x1xf32> to vector<16x128xf32>
    %50 = vector.broadcast %cst_13 : f32 to vector<16x128xf32>
    %51 = arith.select %35, %49, %50 : vector<16x128xi1>, vector<16x128xf32>
    %52 = arith.addf %31, %51 : vector<16x128xf32>
    %cst_14 = arith.constant 1.000000e+30 : f32
    %53 = vector.broadcast %cst_14 : f32 to vector<16x128xf32>
    %54 = arith.select %35, %53, %30 : vector<16x128xi1>, vector<16x128xf32>
    %cst_15 = arith.constant dense<0x7F800000> : vector<16xf32>
    %55 = vector.multi_reduction <minimumf>, %54, %cst_15 [1] : vector<16x128xf32> to vector<16xf32>
    %56 = vector.shape_cast %55 : vector<16xf32> to vector<16x1xf32>
    %57 = vector.broadcast %56 : vector<16x1xf32> to vector<16x128xf32>
    %58 = arith.cmpf oeq, %54, %57 : vector<16x128xf32>
    %cst_16 = arith.constant 1.000000e+30 : f32
    %59 = vector.broadcast %cst_16 : f32 to vector<16x1xf32>
    %60 = arith.cmpf olt, %56, %59 : vector<16x1xf32>
    %61 = arith.extui %60 : vector<16x1xi1> to vector<16x1xi32>
    %62 = arith.sitofp %61 : vector<16x1xi32> to vector<16x1xf32>
    %cst_17 = arith.constant 1.000000e-16 : f32
    %63 = vector.broadcast %cst_17 : f32 to vector<16x1xf32>
    %64 = arith.maximumf %56, %63 : vector<16x1xf32>
    %65 = tpu.reciprocal %64 {approx = true} : vector<16x1xf32> -> vector<16x1xf32>
    %66 = arith.mulf %64, %65 : vector<16x1xf32>
    %cst_18 = arith.constant 2.000000e+00 : f32
    %67 = vector.broadcast %cst_18 : f32 to vector<16x1xf32>
    %68 = arith.subf %67, %66 : vector<16x1xf32>
    %69 = arith.mulf %65, %68 : vector<16x1xf32>
    %70 = arith.mulf %62, %69 : vector<16x1xf32>
    %cst_19 = arith.constant 0.000000e+00 : f32
    %71 = vector.shape_cast %70 : vector<16x1xf32> to vector<16x1xf32>
    %72 = vector.broadcast %71 : vector<16x1xf32> to vector<16x128xf32>
    %73 = vector.broadcast %cst_19 : f32 to vector<16x128xf32>
    %74 = arith.select %58, %72, %73 : vector<16x128xi1>, vector<16x128xf32>
    %75 = arith.addf %52, %74 : vector<16x128xf32>
    %cst_20 = arith.constant 1.000000e+30 : f32
    %76 = vector.broadcast %cst_20 : f32 to vector<16x128xf32>
    %77 = arith.select %58, %76, %54 : vector<16x128xi1>, vector<16x128xf32>
    %cst_21 = arith.constant dense<0x7F800000> : vector<16xf32>
    %78 = vector.multi_reduction <minimumf>, %77, %cst_21 [1] : vector<16x128xf32> to vector<16xf32>
    %79 = vector.shape_cast %78 : vector<16xf32> to vector<16x1xf32>
    %80 = vector.broadcast %79 : vector<16x1xf32> to vector<16x128xf32>
    %81 = arith.cmpf oeq, %77, %80 : vector<16x128xf32>
    %cst_22 = arith.constant 1.000000e+30 : f32
    %82 = vector.broadcast %cst_22 : f32 to vector<16x1xf32>
    %83 = arith.cmpf olt, %79, %82 : vector<16x1xf32>
    %84 = arith.extui %83 : vector<16x1xi1> to vector<16x1xi32>
    %85 = arith.sitofp %84 : vector<16x1xi32> to vector<16x1xf32>
    %cst_23 = arith.constant 1.000000e-16 : f32
    %86 = vector.broadcast %cst_23 : f32 to vector<16x1xf32>
    %87 = arith.maximumf %79, %86 : vector<16x1xf32>
    %88 = tpu.reciprocal %87 {approx = true} : vector<16x1xf32> -> vector<16x1xf32>
    %89 = arith.mulf %87, %88 : vector<16x1xf32>
    %cst_24 = arith.constant 2.000000e+00 : f32
    %90 = vector.broadcast %cst_24 : f32 to vector<16x1xf32>
    %91 = arith.subf %90, %89 : vector<16x1xf32>
    %92 = arith.mulf %88, %91 : vector<16x1xf32>
    %93 = arith.mulf %85, %92 : vector<16x1xf32>
    %cst_25 = arith.constant 0.000000e+00 : f32
    %94 = vector.shape_cast %93 : vector<16x1xf32> to vector<16x1xf32>
    %95 = vector.broadcast %94 : vector<16x1xf32> to vector<16x128xf32>
    %96 = vector.broadcast %cst_25 : f32 to vector<16x128xf32>
    %97 = arith.select %81, %95, %96 : vector<16x128xi1>, vector<16x128xf32>
    %98 = arith.addf %75, %97 : vector<16x128xf32>
    %cst_26 = arith.constant dense<0.000000e+00> : vector<16xf32>
    %99 = vector.multi_reduction <add>, %98, %cst_26 [1] : vector<16x128xf32> to vector<16xf32>
    %100 = vector.shape_cast %99 : vector<16xf32> to vector<16x1xf32>
    %c0_27 = arith.constant 0 : index
    %c0_28 = arith.constant 0 : index
    %101 = vector.load %arg1[%c0_27, %c0_28] : memref<128x128xf32, #tpu.memory_space<vmem>>, vector<128x128xf32>
    %cst_29 = arith.constant dense<0.000000e+00> : vector<16x128xf32>
    %102 = tpu.matmul %98, %101, %cst_29 {dimension_numbers = #tpu.dot_dimension_numbers<[1], [0], [0], [1], [0, 0, 1, 1], [], []>} : vector<16x128xf32>, vector<128x128xf32>, vector<16x128xf32> -> vector<16x128xf32>
    %cst_30 = arith.constant 1.000000e-16 : f32
    %103 = vector.broadcast %cst_30 : f32 to vector<16x1xf32>
    %104 = arith.maximumf %100, %103 : vector<16x1xf32>
    %105 = tpu.reciprocal %104 {approx = true} : vector<16x1xf32> -> vector<16x1xf32>
    %106 = arith.mulf %104, %105 : vector<16x1xf32>
    %cst_31 = arith.constant 2.000000e+00 : f32
    %107 = vector.broadcast %cst_31 : f32 to vector<16x1xf32>
    %108 = arith.subf %107, %106 : vector<16x1xf32>
    %109 = arith.mulf %105, %108 : vector<16x1xf32>
    %110 = vector.broadcast %109 : vector<16x1xf32> to vector<16x128xf32>
    %111 = arith.mulf %102, %110 : vector<16x128xf32>
    %c0_32 = arith.constant 0 : index
    %c0_33 = arith.constant 0 : index
    %112 = vector.load %arg7[%c0_32, %c0_33] : memref<128x128xf32, #tpu.memory_space<vmem>>, vector<128x128xf32>
    %cst_34 = arith.constant dense<0.000000e+00> : vector<16x128xf32>
    %113 = tpu.matmul %111, %112, %cst_34 {dimension_numbers = #tpu.dot_dimension_numbers<[1], [0], [0], [1], [0, 0, 1, 1], [], []>} : vector<16x128xf32>, vector<128x128xf32>, vector<16x128xf32> -> vector<16x128xf32>
    %c0_35 = arith.constant 0 : index
    %c0_36 = arith.constant 0 : index
    %114 = vector.load %arg4[%c0_35, %c0_36] : memref<16x128xf32, #tpu.memory_space<vmem>>, vector<16x128xf32>
    %c0_37 = arith.constant 0 : index
    %c0_38 = arith.constant 0 : index
    %115 = vector.load %arg8[%c0_37, %c0_38] : memref<128x128xf32, #tpu.memory_space<vmem>>, vector<128x128xf32>
    %cst_39 = arith.constant dense<0.000000e+00> : vector<16x128xf32>
    %116 = tpu.matmul %114, %115, %cst_39 {dimension_numbers = #tpu.dot_dimension_numbers<[1], [0], [0], [1], [0, 0, 1, 1], [], []>} : vector<16x128xf32>, vector<128x128xf32>, vector<16x128xf32> -> vector<16x128xf32>
    %117 = arith.addf %113, %116 : vector<16x128xf32>
    %c0_40 = arith.constant 0 : index
    %c0_41 = arith.constant 0 : index
    %118 = vector.load %arg9[%c0_40, %c0_41] : memref<1x128xf32, #tpu.memory_space<vmem>>, vector<1x128xf32>
    %119 = vector.broadcast %118 : vector<1x128xf32> to vector<16x128xf32>
    %120 = arith.addf %117, %119 : vector<16x128xf32>
    %cst_42 = arith.constant 0.000000e+00 : f32
    %121 = vector.broadcast %cst_42 : f32 to vector<16x128xf32>
    %122 = arith.maximumf %120, %121 : vector<16x128xf32>
    %c16_i32 = arith.constant 16 : i32
    %123 = arith.muli %arg0, %c16_i32 : i32
    %124 = tpu.iota {dimensions = array<i32: 0>} : vector<16x1xi32>
    %125 = vector.broadcast %123 : i32 to vector<16x1xi32>
    %126 = arith.addi %124, %125 : vector<16x1xi32>
    %c32_i32 = arith.constant 32 : i32
    %127 = vector.broadcast %c32_i32 : i32 to vector<16x1xi32>
    %128 = arith.cmpi slt, %126, %127 : vector<16x1xi32>
    %129 = arith.extui %128 : vector<16x1xi1> to vector<16x1xi32>
    %130 = arith.sitofp %129 : vector<16x1xi32> to vector<16x1xf32>
    %131 = vector.broadcast %130 : vector<16x1xf32> to vector<16x128xf32>
    %132 = arith.mulf %122, %131 : vector<16x128xf32>
    %c0_43 = arith.constant 0 : index
    %c0_44 = arith.constant 0 : index
    %133 = vector.load %arg10[%c0_43, %c0_44] : memref<16x128xf32, #tpu.memory_space<vmem>>, vector<16x128xf32>
    tpu.vector_store %arg10[%c0_43, %c0_44], %132 {strides = array<i32>} : memref<16x128xf32, #tpu.memory_space<vmem>>, vector<16x128xf32>,
    %cst_45 = arith.constant dense<0.000000e+00> : vector<128xf32>
    %134 = vector.multi_reduction <add>, %132, %cst_45 [0] : vector<16x128xf32> to vector<128xf32>
    %135 = vector.shape_cast %134 : vector<128xf32> to vector<1x128xf32>
    %136 = arith.mulf %132, %132 : vector<16x128xf32>
    %cst_46 = arith.constant dense<0.000000e+00> : vector<128xf32>
    %137 = vector.multi_reduction <add>, %136, %cst_46 [0] : vector<16x128xf32> to vector<128xf32>
    %138 = vector.shape_cast %137 : vector<128xf32> to vector<1x128xf32>
    %139 = tpu.concatenate %135, %138 in 0 : vector<1x128xf32>, vector<1x128xf32> -> vector<2x128xf32>
    %140 = vector.shape_cast %139 : vector<2x128xf32> to vector<1x2x128xf32>
    %c0_47 = arith.constant 0 : index
    %c0_48 = arith.constant 0 : index
    %c0_49 = arith.constant 0 : index
    %141 = vector.load %arg11[%c0_47, %c0_48, %c0_49] : memref<1x2x128xf32, #tpu.memory_space<vmem>>, vector<1x2x128xf32>
    tpu.vector_store %arg11[%c0_47, %c0_48, %c0_49], %140 {strides = array<i32>} : memref<1x2x128xf32, #tpu.memory_space<vmem>>, vector<1x2x128xf32>,
    return
  }
  func.func @transform_0(%arg0: i32) -> (i32, i32) {
    %c0_i32 = arith.constant 0 : i32
    %c0_i32_0 = arith.constant 0 : i32
    %c0_i32_1 = arith.constant 0 : i32
    return %c0_i32, %c0_i32_0 : i32, i32
  }
  func.func @transform_1(%arg0: i32) -> (i32, i32) {
    %c0_i32 = arith.constant 0 : i32
    %c0_i32_0 = arith.constant 0 : i32
    %c0_i32_1 = arith.constant 0 : i32
    return %c0_i32, %c0_i32_0 : i32, i32
  }
  func.func @transform_2(%arg0: i32) -> (i32, i32) {
    %c0_i32 = arith.constant 0 : i32
    %c0_i32_0 = arith.constant 0 : i32
    %c0_i32_1 = arith.constant 0 : i32
    return %c0_i32, %c0_i32_0 : i32, i32
  }
  func.func @transform_3(%arg0: i32) -> (i32, i32) {
    %c0_i32 = arith.constant 0 : i32
    %c0_i32_0 = arith.constant 0 : i32
    return %arg0, %c0_i32 : i32, i32
  }
  func.func @transform_4(%arg0: i32) -> (i32, i32) {
    %c0_i32 = arith.constant 0 : i32
    %c0_i32_0 = arith.constant 0 : i32
    return %arg0, %c0_i32 : i32, i32
  }
  func.func @transform_5(%arg0: i32) -> (i32, i32) {
    %c0_i32 = arith.constant 0 : i32
    %c0_i32_0 = arith.constant 0 : i32
    return %arg0, %c0_i32 : i32, i32
  }
  func.func @transform_6(%arg0: i32) -> (i32, i32) {
    %c0_i32 = arith.constant 0 : i32
    %c0_i32_0 = arith.constant 0 : i32
    %c0_i32_1 = arith.constant 0 : i32
    return %c0_i32, %c0_i32_0 : i32, i32
  }
  func.func @transform_7(%arg0: i32) -> (i32, i32) {
    %c0_i32 = arith.constant 0 : i32
    %c0_i32_0 = arith.constant 0 : i32
    %c0_i32_1 = arith.constant 0 : i32
    return %c0_i32, %c0_i32_0 : i32, i32
  }
  func.func @transform_8(%arg0: i32) -> (i32, i32) {
    %c0_i32 = arith.constant 0 : i32
    %c0_i32_0 = arith.constant 0 : i32
    %c0_i32_1 = arith.constant 0 : i32
    return %c0_i32, %c0_i32_0 : i32, i32
  }
  func.func @transform_9(%arg0: i32) -> (i32, i32) {
    %c0_i32 = arith.constant 0 : i32
    %c0_i32_0 = arith.constant 0 : i32
    return %arg0, %c0_i32 : i32, i32
  }
  func.func @transform_10(%arg0: i32) -> (i32, i32, i32) {
    %c0_i32 = arith.constant 0 : i32
    %c0_i32_0 = arith.constant 0 : i32
    %c0_i32_1 = arith.constant 0 : i32
    return %arg0, %c0_i32, %c0_i32_0 : i32, i32, i32
  }
}

</mosaic_0001>

<llo_original>
// kernel: tpu_custom_call.1
$region0: #{tpu_custom_call.1}
  #allocation0 [shape = 'u32[]', space=smem, size = 0x4, offset = 0x4, fixed_abs, tag = 'smem constant byte address 0x4 - core index']
  #allocation1 [shape = 'u32[144,128]{1,0:T(1,128)}', space=vmem, size = 0x12000, scoped, tag = 'internal scratch']
  %s0 = inlined_call_operand.hbm [shape: f32[128,128], index: 0, kind: input, shape index: {}]
  %s1 = inlined_call_operand.vmem [shape: f32[3,128], index: 1, kind: input, shape index: {}]
  %s2 = inlined_call_operand.vmem [shape: s32[1,128], index: 2, kind: input, shape index: {}]
  %s3 = inlined_call_operand.vmem [shape: f32[32,128], index: 3, kind: input, shape index: {}]
  %s4 = inlined_call_operand.vmem [shape: f32[32,3], index: 4, kind: input, shape index: {}]
  %s5 = inlined_call_operand.vmem [shape: s32[32,1], index: 5, kind: input, shape index: {}]
  %s6 = inlined_call_operand.hbm [shape: f32[128,128], index: 6, kind: input, shape index: {}]
  %s7 = inlined_call_operand.hbm [shape: f32[128,128], index: 7, kind: input, shape index: {}]
  %s8 = inlined_call_operand.vmem [shape: f32[1,128], index: 8, kind: input, shape index: {}]
  %s9 = inlined_call_operand.hbm [shape: f32[32,128], index: 9, kind: output, shape index: {0}]
  %s10 = inlined_call_operand.hbm [shape: f32[2,2,128], index: 10, kind: output, shape index: {1}]
  %11 = xla_tuple %s9, %s10
  %s12 = sld [smem:[#allocation0]]
  $region89: #{tpu_custom_call.1} parent=0
    _
  %s14 = ssub.s32 1, %s12
  %s15 = scalar_select 0, %s14, %s12
  $region1: #{tpu_custom_call.1} parent=0
    #allocation2 [shape = 'u8[65536]{0}', space=vmem, size = 0x10000, scoped, tag = 'input window, operand 0, single buffered']
    #allocation3 [shape = 's32[2]{0}', space=sflag, size = 0x8, scoped, tag = 'scoped memory for tpu_custom_call.1']
    #allocation4 [shape = 's32[2]{0}', space=sflag, size = 0x8, scoped, tag = 'scoped memory for tpu_custom_call.1']
    #allocation5 [shape = 'u8[65536]{0}', space=vmem, size = 0x10000, scoped, tag = 'input window, operand 6, single buffered']
    #allocation6 [shape = 's32[1]{0}', space=sflag, size = 0x4, scoped, tag = 'scoped memory for tpu_custom_call.1']
    #allocation7 [shape = 'u8[65536]{0}', space=vmem, size = 0x10000, scoped, tag = 'input window, operand 7, single buffered']
    #allocation8 [shape = 'u8[16384]{0}', space=vmem, size = 0x4000, scoped, tag = 'output window, operand 0']
    #allocation9 [shape = 'u8[2048]{0}', space=vmem, size = 0x800, scoped, tag = 'output window, operand 1']
    #allocation10 [shape = 's32[2]{0}', space=sflag, size = 0x8, scoped, tag = 'scoped memory for tpu_custom_call.1']
    %16 = vsyncpa [#allocation3], 0
    %17 = vsyncpa [#allocation6], 0
    %18 = vsyncpa [#allocation4], 0
    %s19 = scalar_lea.sflag [#allocation4], 1
    %20 = vsyncpa %s19, 0
    %21 = vsyncpa [#allocation10], 0
    %s22 = scalar_lea.sflag [#allocation10], 1
    %23 = vsyncpa %s22, 0
    loop: start=0, step=1, limit=4
    $region2: #{tpu_custom_call.1} parent=1 // loop_pre_header
      _
    $region3: #{tpu_custom_call.1} parent=1 // loop_header
      %s25 = sphi 0, %s29
      %p26 = scmp.ge.s32.totalorder %s25, 4
      %s33 = sphi 0, %s33
      %s35 = sphi 0, %s33
      %s36 = sphi 0, %s35
      %s50 = sphi 0, %s36
      %s54 = sphi 0, %s54
      %s56 = sphi 0, %s54
      %s57 = sphi 0, %s56
      %s71 = sphi 0, %s57
      %s75 = sphi 0, %s75
      %s77 = sphi 0, %s75
      %s78 = sphi 0, %s77
      %s92 = sphi 0, %s78
      %s98 = sphi 0, %s100
      %s101 = sphi 0, %s98
      %s102 = sphi 0, %s101
      %s118 = sphi 0, %s102
      %s124 = sphi 0, %s126
      %s127 = sphi 0, %s124
      %s128 = sphi 0, %s127
      %s144 = sphi 0, %s128
      %s150 = sphi 0, %s152
      %s153 = sphi 0, %s150
      %s154 = sphi 0, %s153
      %s170 = sphi 0, %s154
      %s174 = sphi 0, %s174
      %s176 = sphi 0, %s174
      %s177 = sphi 0, %s176
      %s191 = sphi 0, %s177
      %s195 = sphi 0, %s195
      %s197 = sphi 0, %s195
      %s198 = sphi 0, %s197
      %s212 = sphi 0, %s198
      %s216 = sphi 0, %s216
      %s218 = sphi 0, %s216
      %s219 = sphi 0, %s218
      %s233 = sphi 0, %s219
      %s239 = sphi 0, %s241
      %s242 = sphi 0, %s239
      %s243 = sphi 0, %s242
      %s259 = sphi 0, %s243
      %s265 = sphi 0, %s267
      %s268 = sphi 0, %s265
      %s269 = sphi 0, %s268
      %s285 = sphi 0, %s269
    $region4: #{tpu_custom_call.1} parent=1 // loop_header_branch
      %28 = sbr.rel (%p26) target = $region8
    $region5: #{tpu_custom_call.1} parent=1 // loop_body
      %s30 = ssub.s32 %s25, 1
      %s31 = ssub.s32 %s25, 2
      %s32 = sadd.s32 %s25, 1
      %s34 = sadd.s32 %s33, 1
      %p37 = scmp.eq.s32.totalorder %s25, 1
      %p38 = scmp.ne.s32.totalorder %s33, %s35
      %p39 = scmp.eq.s32.totalorder %s25, 0
      %p40 = por %p38, %p39
      %p41 = scmp.ne.s32.totalorder %s33, %s35
      %p42 = scmp.eq.s32.totalorder %s30, 1
      %p43 = por %p41, %p42
      %p44 = scmp.ne.s32.totalorder %s35, %s36
      %p45 = scmp.eq.s32.totalorder %s30, 0
      %p46 = por %p44, %p45
      %p47 = scmp.ne.s32.totalorder %s35, %s36
      %p48 = scmp.eq.s32.totalorder %s31, 1
      %p49 = por %p47, %p48
      %p51 = scmp.ne.s32.totalorder %s36, %s50
      %p52 = scmp.eq.s32.totalorder %s31, 0
      %p53 = por %p51, %p52
      %s55 = sadd.s32 %s54, 1
      %p58 = scmp.eq.s32.totalorder %s25, 1
      %p59 = scmp.ne.s32.totalorder %s54, %s56
      %p60 = scmp.eq.s32.totalorder %s25, 0
      %p61 = por %p59, %p60
      %p62 = scmp.ne.s32.totalorder %s54, %s56
      %p63 = scmp.eq.s32.totalorder %s30, 1
      %p64 = por %p62, %p63
      %p65 = scmp.ne.s32.totalorder %s56, %s57
      %p66 = scmp.eq.s32.totalorder %s30, 0
      %p67 = por %p65, %p66
      %p68 = scmp.ne.s32.totalorder %s56, %s57
      %p69 = scmp.eq.s32.totalorder %s31, 1
      %p70 = por %p68, %p69
      %p72 = scmp.ne.s32.totalorder %s57, %s71
      %p73 = scmp.eq.s32.totalorder %s31, 0
      %p74 = por %p72, %p73
      %s76 = sadd.s32 %s75, 1
      %p79 = scmp.eq.s32.totalorder %s25, 1
      %p80 = scmp.ne.s32.totalorder %s75, %s77
      %p81 = scmp.eq.s32.totalorder %s25, 0
      %p82 = por %p80, %p81
      %p83 = scmp.ne.s32.totalorder %s75, %s77
      %p84 = scmp.eq.s32.totalorder %s30, 1
      %p85 = por %p83, %p84
      %p86 = scmp.ne.s32.totalorder %s77, %s78
      %p87 = scmp.eq.s32.totalorder %s30, 0
      %p88 = por %p86, %p87
      %p89 = scmp.ne.s32.totalorder %s77, %s78
      %p90 = scmp.eq.s32.totalorder %s31, 1
      %p91 = por %p89, %p90
      %p93 = scmp.ne.s32.totalorder %s78, %s92
      %p94 = scmp.eq.s32.totalorder %s31, 0
      %p95 = por %p93, %p94
      %s96 = ssub.s32 %s25, %s32
      %p97 = scmp.eq.s32.totalorder %s96, 0
      %s99 = sadd.s32 %s98, 1
      %s100 = scalar_select %p97, %s98, %s99
      %p103 = pneg %p97
      %p104 = scmp.eq.s32.totalorder %s25, 1
      %p105 = por %p103, %p104
      %p106 = scmp.ne.s32.totalorder %s98, %s101
      %p107 = scmp.eq.s32.totalorder %s25, 0
      %p108 = por %p106, %p107
      %p109 = scmp.ne.s32.totalorder %s98, %s101
      %p110 = scmp.eq.s32.totalorder %s30, 1
      %p111 = por %p109, %p110
      %p112 = scmp.ne.s32.totalorder %s101, %s102
      %p113 = scmp.eq.s32.totalorder %s30, 0
      %p114 = por %p112, %p113
      %p115 = scmp.ne.s32.totalorder %s101, %s102
      %p116 = scmp.eq.s32.totalorder %s31, 1
      %p117 = por %p115, %p116
      %p119 = scmp.ne.s32.totalorder %s102, %s118
      %p120 = scmp.eq.s32.totalorder %s31, 0
      %p121 = por %p119, %p120
      %s122 = ssub.s32 %s25, %s32
      %p123 = scmp.eq.s32.totalorder %s122, 0
      %s125 = sadd.s32 %s124, 1
      %s126 = scalar_select %p123, %s124, %s125
      %p129 = pneg %p123
      %p130 = scmp.eq.s32.totalorder %s25, 1
      %p131 = por %p129, %p130
      %p132 = scmp.ne.s32.totalorder %s124, %s127
      %p133 = scmp.eq.s32.totalorder %s25, 0
      %p134 = por %p132, %p133
      %p135 = scmp.ne.s32.totalorder %s124, %s127
      %p136 = scmp.eq.s32.totalorder %s30, 1
      %p137 = por %p135, %p136
      %p138 = scmp.ne.s32.totalorder %s127, %s128
      %p139 = scmp.eq.s32.totalorder %s30, 0
      %p140 = por %p138, %p139
      %p141 = scmp.ne.s32.totalorder %s127, %s128
      %p142 = scmp.eq.s32.totalorder %s31, 1
      %p143 = por %p141, %p142
      %p145 = scmp.ne.s32.totalorder %s128, %s144
      %p146 = scmp.eq.s32.totalorder %s31, 0
      %p147 = por %p145, %p146
      %s148 = ssub.s32 %s25, %s32
      %p149 = scmp.eq.s32.totalorder %s148, 0
      %s151 = sadd.s32 %s150, 1
      %s152 = scalar_select %p149, %s150, %s151
      %p155 = pneg %p149
      %p156 = scmp.eq.s32.totalorder %s25, 1
      %p157 = por %p155, %p156
      %p158 = scmp.ne.s32.totalorder %s150, %s153
      %p159 = scmp.eq.s32.totalorder %s25, 0
      %p160 = por %p158, %p159
      %p161 = scmp.ne.s32.totalorder %s150, %s153
      %p162 = scmp.eq.s32.totalorder %s30, 1
      %p163 = por %p161, %p162
      %p164 = scmp.ne.s32.totalorder %s153, %s154
      %p165 = scmp.eq.s32.totalorder %s30, 0
      %p166 = por %p164, %p165
      %p167 = scmp.ne.s32.totalorder %s153, %s154
      %p168 = scmp.eq.s32.totalorder %s31, 1
      %p169 = por %p167, %p168
      %p171 = scmp.ne.s32.totalorder %s154, %s170
      %p172 = scmp.eq.s32.totalorder %s31, 0
      %p173 = por %p171, %p172
      %s175 = sadd.s32 %s174, 1
      %p178 = scmp.eq.s32.totalorder %s25, 1
      %p179 = scmp.ne.s32.totalorder %s174, %s176
      %p180 = scmp.eq.s32.totalorder %s25, 0
      %p181 = por %p179, %p180
      %p182 = scmp.ne.s32.totalorder %s174, %s176
      %p183 = scmp.eq.s32.totalorder %s30, 1
      %p184 = por %p182, %p183
      %p185 = scmp.ne.s32.totalorder %s176, %s177
      %p186 = scmp.eq.s32.totalorder %s30, 0
      %p187 = por %p185, %p186
      %p188 = scmp.ne.s32.totalorder %s176, %s177
      %p189 = scmp.eq.s32.totalorder %s31, 1
      %p190 = por %p188, %p189
      %p192 = scmp.ne.s32.totalorder %s177, %s191
      %p193 = scmp.eq.s32.totalorder %s31, 0
      %p194 = por %p192, %p193
      %s196 = sadd.s32 %s195, 1
      %p199 = scmp.eq.s32.totalorder %s25, 1
      %p200 = scmp.ne.s32.totalorder %s195, %s197
      %p201 = scmp.eq.s32.totalorder %s25, 0
      %p202 = por %p200, %p201
      %p203 = scmp.ne.s32.totalorder %s195, %s197
      %p204 = scmp.eq.s32.totalorder %s30, 1
      %p205 = por %p203, %p204
      %p206 = scmp.ne.s32.totalorder %s197, %s198
      %p207 = scmp.eq.s32.totalorder %s30, 0
      %p208 = por %p206, %p207
      %p209 = scmp.ne.s32.totalorder %s197, %s198
      %p210 = scmp.eq.s32.totalorder %s31, 1
      %p211 = por %p209, %p210
      %p213 = scmp.ne.s32.totalorder %s198, %s212
      %p214 = scmp.eq.s32.totalorder %s31, 0
      %p215 = por %p213, %p214
      %s217 = sadd.s32 %s216, 1
      %p220 = scmp.eq.s32.totalorder %s25, 1
      %p221 = scmp.ne.s32.totalorder %s216, %s218
      %p222 = scmp.eq.s32.totalorder %s25, 0
      %p223 = por %p221, %p222
      %p224 = scmp.ne.s32.totalorder %s216, %s218
      %p225 = scmp.eq.s32.totalorder %s30, 1
      %p226 = por %p224, %p225
      %p227 = scmp.ne.s32.totalorder %s218, %s219
      %p228 = scmp.eq.s32.totalorder %s30, 0
      %p229 = por %p227, %p228
      %p230 = scmp.ne.s32.totalorder %s218, %s219
      %p231 = scmp.eq.s32.totalorder %s31, 1
      %p232 = por %p230, %p231
      %p234 = scmp.ne.s32.totalorder %s219, %s233
      %p235 = scmp.eq.s32.totalorder %s31, 0
      %p236 = por %p234, %p235
      %s237 = ssub.s32 %s25, %s32
      %p238 = scmp.eq.s32.totalorder %s237, 0
      %s240 = sadd.s32 %s239, 1
      %s241 = scalar_select %p238, %s239, %s240
      %p244 = pneg %p238
      %p245 = scmp.eq.s32.totalorder %s25, 1
      %p246 = por %p244, %p245
      %p247 = scmp.ne.s32.totalorder %s239, %s242
      %p248 = scmp.eq.s32.totalorder %s25, 0
      %p249 = por %p247, %p248
      %p250 = scmp.ne.s32.totalorder %s239, %s242
      %p251 = scmp.eq.s32.totalorder %s30, 1
      %p252 = por %p250, %p251
      %p253 = scmp.ne.s32.totalorder %s242, %s243
      %p254 = scmp.eq.s32.totalorder %s30, 0
      %p255 = por %p253, %p254
      %p256 = scmp.ne.s32.totalorder %s242, %s243
      %p257 = scmp.eq.s32.totalorder %s31, 1
      %p258 = por %p256, %p257
      %p260 = scmp.ne.s32.totalorder %s243, %s259
      %p261 = scmp.eq.s32.totalorder %s31, 0
      %p262 = por %p260, %p261
      %s263 = ssub.s32 %s25, %s32
      %p264 = scmp.eq.s32.totalorder %s263, 0
      %s266 = sadd.s32 %s265, 1
      %s267 = scalar_select %p264, %s265, %s266
      %p270 = pneg %p264
      %p271 = scmp.eq.s32.totalorder %s25, 1
      %p272 = por %p270, %p271
      %p273 = scmp.ne.s32.totalorder %s265, %s268
      %p274 = scmp.eq.s32.totalorder %s25, 0
      %p275 = por %p273, %p274
      %p276 = scmp.ne.s32.totalorder %s265, %s268
      %p277 = scmp.eq.s32.totalorder %s30, 1
      %p278 = por %p276, %p277
      %p279 = scmp.ne.s32.totalorder %s268, %s269
      %p280 = scmp.eq.s32.totalorder %s30, 0
      %p281 = por %p279, %p280
      %p282 = scmp.ne.s32.totalorder %s268, %s269
      %p283 = scmp.eq.s32.totalorder %s31, 1
      %p284 = por %p282, %p283
      %p286 = scmp.ne.s32.totalorder %s269, %s285
      %p287 = scmp.eq.s32.totalorder %s31, 0
      %p288 = por %p286, %p287
      %p289 = scmp.le.s32.totalorder 1, %s25
      %p290 = scmp.lt.s32.totalorder %s25, 3
      %p291 = pnand %p289, %p290
      %p292 = pneg %p291
      // Predicated region
      $region9: #{tpu_custom_call.1} parent=5 // pred_check
        _
      $region10: #{tpu_custom_call.1} parent=5 // pred_check_branch
        %294 = sbr.rel (%p291) target = $region12
      $region11: #{tpu_custom_call.1} parent=5 // pred_region
        %s295 = ssub.s32 %s25, 1
        // Predicated region
        $region13: #{tpu_custom_call.1} parent=11 // pred_check
          %p296 = pneg %p46
        $region14: #{tpu_custom_call.1} parent=11 // pred_check_branch
          %298 = sbr.rel (%p296) target = $region16
        $region15: #{tpu_custom_call.1} parent=11 // pred_region
          %s300 = ssub.s32 2048, 2048
          %301 = vsyncadd [#allocation3], %s300
          %s302 = sshll.u32 [#allocation2], 4
          %s303 = int_to_ptr.vmem [resolvable:$true] %s302
          %308 = dma.hbm_to_vmem [thread:$0]  %s0, 2048, %s303, [#allocation3], 128, 128, 8
        $region16: #{tpu_custom_call.1} parent=11 // pred_fallthru
          _
        // Predicated region
        $region17: #{tpu_custom_call.1} parent=11 // pred_check
          %p309 = pneg %p67
        $region18: #{tpu_custom_call.1} parent=11 // pred_check_branch
          %311 = sbr.rel (%p309) target = $region20
        $region19: #{tpu_custom_call.1} parent=11 // pred_region
          _
        $region20: #{tpu_custom_call.1} parent=11 // pred_fallthru
          _
        // Predicated region
        $region21: #{tpu_custom_call.1} parent=11 // pred_check
          %p312 = pneg %p88
        $region22: #{tpu_custom_call.1} parent=11 // pred_check_branch
          %314 = sbr.rel (%p312) target = $region24
        $region23: #{tpu_custom_call.1} parent=11 // pred_region
          _
        $region24: #{tpu_custom_call.1} parent=11 // pred_fallthru
          _
        // Predicated region
        $region25: #{tpu_custom_call.1} parent=11 // pred_check
          %p315 = pneg %p187
        $region26: #{tpu_custom_call.1} parent=11 // pred_check_branch
          %317 = sbr.rel (%p315) target = $region28
        $region27: #{tpu_custom_call.1} parent=11 // pred_region
          %s319 = ssub.s32 2048, 2048
          %320 = vsyncadd [#allocation6], %s319
          %s321 = sshll.u32 [#allocation5], 4
          %s322 = int_to_ptr.vmem [resolvable:$true] %s321
          %327 = dma.hbm_to_vmem [thread:$0]  %s6, 2048, %s322, [#allocation6], 128, 128, 8
        $region28: #{tpu_custom_call.1} parent=11 // pred_fallthru
          _
        // Predicated region
        $region29: #{tpu_custom_call.1} parent=11 // pred_check
          %p328 = pneg %p208
        $region30: #{tpu_custom_call.1} parent=11 // pred_check_branch
          %330 = sbr.rel (%p328) target = $region32
        $region31: #{tpu_custom_call.1} parent=11 // pred_region
          %s332 = ssub.s32 2048, 2048
          %333 = vsyncadd [#allocation6], %s332
          %s334 = sshll.u32 [#allocation7], 4
          %s335 = int_to_ptr.vmem [resolvable:$true] %s334
          %340 = dma.hbm_to_vmem [thread:$0]  %s7, 2048, %s335, [#allocation6], 128, 128, 8
        $region32: #{tpu_custom_call.1} parent=11 // pred_fallthru
          _
        // Predicated region
        $region33: #{tpu_custom_call.1} parent=11 // pred_check
          %p341 = pneg %p229
        $region34: #{tpu_custom_call.1} parent=11 // pred_check_branch
          %343 = sbr.rel (%p341) target = $region36
        $region35: #{tpu_custom_call.1} parent=11 // pred_region
          _
        $region36: #{tpu_custom_call.1} parent=11 // pred_fallthru
          _
      $region12: #{tpu_custom_call.1} parent=5 // pred_fallthru
        _
      %p344 = scmp.lt.s32.totalorder %s25, 2
      // Predicated region
      $region37: #{tpu_custom_call.1} parent=5 // pred_check
        %p345 = pneg %p344
      $region38: #{tpu_custom_call.1} parent=5 // pred_check_branch
        %347 = sbr.rel (%p345) target = $region40
      $region39: #{tpu_custom_call.1} parent=5 // pred_region
        // Predicated region
        $region41: #{tpu_custom_call.1} parent=39 // pred_check
          %p348 = pneg %p108
        $region42: #{tpu_custom_call.1} parent=39 // pred_check_branch
          %350 = sbr.rel (%p348) target = $region44
        $region43: #{tpu_custom_call.1} parent=39 // pred_region
          %s351 = smul.u32 2, %s25
          %p352 = scmp.lt.s32.totalorder %s351, 3
          %s353 = scalar_select %p352, %s351, 3
          %s354 = smul.addr %s353, 8
          %s355 = scalar_lea.vmem %s3, %s354
          %s356 = smul.u32 2, %s25
        $region44: #{tpu_custom_call.1} parent=39 // pred_fallthru
          _
        // Predicated region
        $region45: #{tpu_custom_call.1} parent=39 // pred_check
          %p357 = pneg %p134
        $region46: #{tpu_custom_call.1} parent=39 // pred_check_branch
          %359 = sbr.rel (%p357) target = $region48
        $region47: #{tpu_custom_call.1} parent=39 // pred_region
          %s360 = smul.u32 2, %s25
          %p361 = scmp.lt.s32.totalorder %s360, 3
          %s362 = scalar_select %p361, %s360, 3
          %s363 = smul.addr %s362, 8
          %s364 = scalar_lea.vmem %s4, %s363
          %s365 = smul.u32 2, %s25
        $region48: #{tpu_custom_call.1} parent=39 // pred_fallthru
          _
        // Predicated region
        $region49: #{tpu_custom_call.1} parent=39 // pred_check
          %p366 = pneg %p160
        $region50: #{tpu_custom_call.1} parent=39 // pred_check_branch
          %368 = sbr.rel (%p366) target = $region52
        $region51: #{tpu_custom_call.1} parent=39 // pred_region
          %s369 = smul.u32 2, %s25
          %p370 = scmp.lt.s32.totalorder %s369, 3
          %s371 = scalar_select %p370, %s369, 3
          %s372 = smul.addr %s371, 8
          %s373 = scalar_lea.vmem %s5, %s372
          %s374 = smul.u32 2, %s25
        $region52: #{tpu_custom_call.1} parent=39 // pred_fallthru
          _
      $region40: #{tpu_custom_call.1} parent=5 // pred_fallthru
        _
      %p375 = scmp.le.s32.totalorder 1, %s25
      %p376 = scmp.lt.s32.totalorder %s25, 3
      %p377 = pnand %p375, %p376
      %p378 = pneg %p377
      // Predicated region
      $region53: #{tpu_custom_call.1} parent=5 // pred_check
        _
      $region54: #{tpu_custom_call.1} parent=5 // pred_check_branch
        %380 = sbr.rel (%p377) target = $region56
      $region55: #{tpu_custom_call.1} parent=5 // pred_region
        %s381 = ssub.s32 %s25, 1
        // Predicated region
        $region57: #{tpu_custom_call.1} parent=55 // pred_check
          %p382 = pneg %p46
        $region58: #{tpu_custom_call.1} parent=55 // pred_check_branch
          %384 = sbr.rel (%p382) target = $region60
        $region59: #{tpu_custom_call.1} parent=55 // pred_region
          %385 = dma.done [#allocation3], 2048
        $region60: #{tpu_custom_call.1} parent=55 // pred_fallthru
          _
        // Predicated region
        $region61: #{tpu_custom_call.1} parent=55 // pred_check
          %p386 = pneg %p187
        $region62: #{tpu_custom_call.1} parent=55 // pred_check_branch
          %388 = sbr.rel (%p386) target = $region64
        $region63: #{tpu_custom_call.1} parent=55 // pred_region
          %389 = dma.done [#allocation6], 2048
        $region64: #{tpu_custom_call.1} parent=55 // pred_fallthru
          _
        // Predicated region
        $region65: #{tpu_custom_call.1} parent=55 // pred_check
          %p390 = pneg %p208
        $region66: #{tpu_custom_call.1} parent=55 // pred_check_branch
          %392 = sbr.rel (%p390) target = $region68
        $region67: #{tpu_custom_call.1} parent=55 // pred_region
          %393 = dma.done [#allocation6], 2048
        $region68: #{tpu_custom_call.1} parent=55 // pred_fallthru
          _
        %p394 = pneg %p46
        %p395 = pneg %p43
        %p396 = pneg %p67
        %p397 = pneg %p64
        %p398 = pneg %p88
        %p399 = pneg %p85
        %s400 = smul.u32 2, %s30
        %p401 = scmp.lt.s32.totalorder %s400, 3
        %s402 = scalar_select %p401, %s400, 3
        %s403 = smul.addr %s402, 8
        %s404 = scalar_lea.vmem %s3, %s403
        %p405 = pneg %p114
        %p406 = pneg %p111
        %s407 = smul.u32 2, %s30
        %p408 = scmp.lt.s32.totalorder %s407, 3
        %s409 = scalar_select %p408, %s407, 3
        %s410 = smul.addr %s409, 8
        %s411 = scalar_lea.vmem %s4, %s410
        %p412 = pneg %p140
        %p413 = pneg %p137
        %s414 = smul.u32 2, %s30
        %p415 = scmp.lt.s32.totalorder %s414, 3
        %s416 = scalar_select %p415, %s414, 3
        %s417 = smul.addr %s416, 8
        %s418 = scalar_lea.vmem %s5, %s417
        %p419 = pneg %p166
        %p420 = pneg %p163
        %p421 = pneg %p187
        %p422 = pneg %p184
        %p423 = pneg %p208
        %p424 = pneg %p205
        %p425 = pneg %p229
        %p426 = pneg %p226
        %p427 = pneg %p255
        %p428 = pneg %p252
        %s429 = sand.u32 %s242, 1
        %s430 = scalar_lea.sflag [#allocation4], %s429
        %s431 = sand.u32 %s242, 1
        %s432 = smul.addr %s431, 16
        %s433 = scalar_lea.vmem [#allocation8], %s432
        %p434 = pneg %p281
        %p435 = pneg %p278
        %s436 = sand.u32 %s268, 1
        %s437 = scalar_lea.sflag [#allocation10], %s436
        %s438 = sand.u32 %s268, 1
        %s439 = smul.addr %s438, 2
        %s440 = scalar_lea.vmem [#allocation9], %s439
        %s441 = smul.u32 2, %s30
        %p442 = scmp.lt.s32.totalorder %s441, 3
        %s443 = scalar_select %p442, %s441, 3
        %s444 = smul.addr %s443, 8
        %s445 = scalar_lea.vmem %s3, %s444
        %s446 = smul.u32 2, %s30
        %s447 = smul.u32 2, %s30
        %p448 = scmp.lt.s32.totalorder %s447, 3
        %s449 = scalar_select %p448, %s447, 3
        %s450 = smul.addr %s449, 8
        %s451 = scalar_lea.vmem %s4, %s450
        %s452 = smul.u32 2, %s30
        %s453 = smul.u32 2, %s30
        %p454 = scmp.lt.s32.totalorder %s453, 3
        %s455 = scalar_select %p454, %s453, 3
        %s456 = smul.addr %s455, 8
        %s457 = scalar_lea.vmem %s5, %s456
        %s458 = smul.u32 2, %s30
        %s459 = smul.u32 2, %s30
        %v460 = vld [vmem:[%s451] sm:$0xff]
        %v461 = vld [vmem:[%s451 + $0x8] sm:$0xff]
        %v462 = vld [vmem:[%s1] sm:$0x7]
        %v463 = vld [vmem:[%s2] sm:$0x1]
        %v464 = vld [vmem:[%s457] sm:$0xff]
        %v465 = vld [vmem:[%s457 + $0x8] sm:$0xff]
        %467 = vset.pattern.permute.xlu0 0
        %468 = vperm.xlu0 %467, %v460
        %v469 = vpop.permute.xlu0 %468
        %472 = vset.pattern.permute.xlu0 0
        %473 = vperm.xlu0 %472, %v461
        %v474 = vpop.permute.xlu0 %473
        %v476 = vlaneseq
        %v477 = vshrl.u32 %v476, 7
        %v478 = vsub.s32 0, %v477
        %v479 = vrot.slane %v462, %v478
        %v480 = vsub.f32 %v469, %v479
        %v481 = vsub.f32 %v474, %v479
        %v482 = vmul.f32 %v480, %v480
        %v483 = vmul.f32 %v481, %v481
        %v484 = vadd.f32 %v482, 0.0
        %v485 = vadd.f32 %v483, 0.0
        %486 = vset.pattern.permute.xlu0 1
        %487 = vperm.xlu0 %486, %v460
        %v488 = vpop.permute.xlu0 %487
        %490 = vset.pattern.permute.xlu0 1
        %491 = vperm.xlu0 %490, %v461
        %v492 = vpop.permute.xlu0 %491
        %v494 = vlaneseq
        %v495 = vshrl.u32 %v494, 7
        %v496 = vsub.s32 1, %v495
        %v497 = vrot.slane %v462, %v496
        %v498 = vsub.f32 %v488, %v497
        %v499 = vsub.f32 %v492, %v497
        %v500 = vmul.f32 %v498, %v498
        %v501 = vmul.f32 %v499, %v499
        %v502 = vadd.f32 %v484, %v500
        %v503 = vadd.f32 %v485, %v501
        %504 = vset.pattern.permute.xlu0 2
        %505 = vperm.xlu0 %504, %v460
        %v506 = vpop.permute.xlu0 %505
        %508 = vset.pattern.permute.xlu0 2
        %509 = vperm.xlu0 %508, %v461
        %v510 = vpop.permute.xlu0 %509
        %v512 = vlaneseq
        %v513 = vshrl.u32 %v512, 7
        %v514 = vsub.s32 2, %v513
        %v515 = vrot.slane %v462, %v514
        %v516 = vsub.f32 %v506, %v515
        %v517 = vsub.f32 %v510, %v515
        %v518 = vmul.f32 %v516, %v516
        %v519 = vmul.f32 %v517, %v517
        %v520 = vadd.f32 %v502, %v518
        %v521 = vadd.f32 %v503, %v519
        %522 = vset.pattern.permute.xlu0 0
        %523 = vperm.xlu0 %522, %v464
        %v524 = vpop.permute.xlu0 %523
        %525 = vset.pattern.permute.xlu0 0
        %526 = vperm.xlu0 %525, %v465
        %v527 = vpop.permute.xlu0 %526
        %v528 = vlaneseq
        %v529 = vshrl.u32 %v528, 7
        %v530 = vsub.s32 0, %v529
        %v531 = vrot.slane %v463, %v530
        %vm532 = vcmp.eq.s32.totalorder %v524, %v531
        %vm533 = vcmp.eq.s32.totalorder %v527, %v531
        %v534 = vsel %vm532, %v520, 1e+30
        %v535 = vsel %vm533, %v521, 1e+30
        %536 = vmin.xlane.f32.xlu0 %v534
        %v537 = vpop.xlane.xlu0 %536
        %538 = vmin.xlane.f32.xlu0 %v535
        %v539 = vpop.xlane.xlu0 %538
        %vm540 = vcmp.eq.f32.partialorder %v534, %v537
        %vm541 = vcmp.eq.f32.partialorder %v535, %v539
        %vm542 = vcmp.lt.f32.partialorder %v537, 1e+30
        %vm543 = vcmp.lt.f32.partialorder %v539, 1e+30
        %v544 = vsel %vm542, 1, 0
        %v545 = vsel %vm543, 1, 0
        %v546 = vcvt.s32.f32 %v544
        %v547 = vcvt.s32.f32 %v545
        %v548 = vmax.f32 %v537, 1e-16
        %v549 = vmax.f32 %v539, 1e-16
        %v550 = vrcp.pop %v548
        %v551 = vrcp.pop %v549
        %v552 = vmul.f32 %v548, %v550
        %v553 = vmul.f32 %v549, %v551
        %v554 = vsub.f32 2.0, %v552
        %v555 = vsub.f32 2.0, %v553
        %v556 = vmul.f32 %v550, %v554
        %v557 = vmul.f32 %v551, %v555
        %v558 = vmul.f32 %v546, %v556
        %v559 = vmul.f32 %v547, %v557
        %v560 = vsel %vm540, %v558, 0.0
        %v561 = vsel %vm541, %v559, 0.0
        %v562 = vadd.f32 %v560, 0.0
        %v563 = vadd.f32 %v561, 0.0
        %v564 = vsel %vm540, 1e+30, %v534
        %v565 = vsel %vm541, 1e+30, %v535
        %566 = vmin.xlane.f32.xlu0 %v564
        %v567 = vpop.xlane.xlu0 %566
        %568 = vmin.xlane.f32.xlu0 %v565
        %v569 = vpop.xlane.xlu0 %568
        %vm570 = vcmp.eq.f32.partialorder %v564, %v567
        %vm571 = vcmp.eq.f32.partialorder %v565, %v569
        %vm572 = vcmp.lt.f32.partialorder %v567, 1e+30
        %vm573 = vcmp.lt.f32.partialorder %v569, 1e+30
        %v574 = vsel %vm572, 1, 0
        %v575 = vsel %vm573, 1, 0
        %v576 = vcvt.s32.f32 %v574
        %v577 = vcvt.s32.f32 %v575
        %v578 = vmax.f32 %v567, 1e-16
        %v579 = vmax.f32 %v569, 1e-16
        %v580 = vrcp.pop %v578
        %v581 = vrcp.pop %v579
        %v582 = vmul.f32 %v578, %v580
        %v583 = vmul.f32 %v579, %v581
        %v584 = vsub.f32 2.0, %v582
        %v585 = vsub.f32 2.0, %v583
        %v586 = vmul.f32 %v580, %v584
        %v587 = vmul.f32 %v581, %v585
        %v588 = vmul.f32 %v576, %v586
        %v589 = vmul.f32 %v577, %v587
        %v590 = vsel %vm570, %v588, 0.0
        %v591 = vsel %vm571, %v589, 0.0
        %v592 = vadd.f32 %v562, %v590
        %v593 = vadd.f32 %v563, %v591
        %v594 = vsel %vm570, 1e+30, %v564
        %v595 = vsel %vm571, 1e+30, %v565
        %596 = vmin.xlane.f32.xlu0 %v594
        %v597 = vpop.xlane.xlu0 %596
        %598 = vmin.xlane.f32.xlu0 %v595
        %v599 = vpop.xlane.xlu0 %598
        %vm600 = vcmp.eq.f32.partialorder %v594, %v597
        %vm601 = vcmp.eq.f32.partialorder %v595, %v599
        %vm602 = vcmp.lt.f32.partialorder %v597, 1e+30
        %vm603 = vcmp.lt.f32.partialorder %v599, 1e+30
        %v604 = vsel %vm602, 1, 0
        %v605 = vsel %vm603, 1, 0
        %v606 = vcvt.s32.f32 %v604
        %v607 = vcvt.s32.f32 %v605
        %v608 = vmax.f32 %v597, 1e-16
        %v609 = vmax.f32 %v599, 1e-16
        %v610 = vrcp.pop %v608
        %v611 = vrcp.pop %v609
        %v612 = vmul.f32 %v608, %v610
        %v613 = vmul.f32 %v609, %v611
        %v614 = vsub.f32 2.0, %v612
        %v615 = vsub.f32 2.0, %v613
        %v616 = vmul.f32 %v610, %v614
        %v617 = vmul.f32 %v611, %v615
        %v618 = vmul.f32 %v606, %v616
        %v619 = vmul.f32 %v607, %v617
        %v620 = vsel %vm600, %v618, 0.0
        %v621 = vsel %vm601, %v619, 0.0
        %v622 = vadd.f32 %v592, %v620
        %v623 = vadd.f32 %v593, %v621
        %624 = vadd.xlane.f32.xlu0 %v622
        %v625 = vpop.xlane.xlu0 %624
        %626 = vadd.xlane.f32.xlu0 %v623
        %v627 = vpop.xlane.xlu0 %626
        %v628 = vld [vmem:[#allocation2] sm:$0xff]
        %v629 = vld [vmem:[#allocation2 + $0x8] sm:$0xff]
        %v630 = vld [vmem:[#allocation2 + $0x10] sm:$0xff]
        %v631 = vld [vmem:[#allocation2 + $0x18] sm:$0xff]
        %v632 = vld [vmem:[#allocation2 + $0x20] sm:$0xff]
        %v633 = vld [vmem:[#allocation2 + $0x28] sm:$0xff]
        %v634 = vld [vmem:[#allocation2 + $0x30] sm:$0xff]
        %v635 = vld [vmem:[#allocation2 + $0x38] sm:$0xff]
        %v636 = vld [vmem:[#allocation2 + $0x40] sm:$0xff]
        %v637 = vld [vmem:[#allocation2 + $0x48] sm:$0xff]
        %v638 = vld [vmem:[#allocation2 + $0x50] sm:$0xff]
        %v639 = vld [vmem:[#allocation2 + $0x58] sm:$0xff]
        %v640 = vld [vmem:[#allocation2 + $0x60] sm:$0xff]
        %v641 = vld [vmem:[#allocation2 + $0x68] sm:$0xff]
        %v642 = vld [vmem:[#allocation2 + $0x70] sm:$0xff]
        %v643 = vld [vmem:[#allocation2 + $0x78] sm:$0xff]
        %644 = vmatprep.subr.mxu0 0.0
        %645 = vmatpush1.msra.mxu0 %v643
        %646 = vmatprep.subr.mxu0 0.0
        %647 = vmatpush1.msra.mxu0 %v642
        %648 = vmatprep.subr.mxu0 0.0
        %649 = vmatpush1.msra.mxu0 %v641
        %650 = vmatprep.subr.mxu0 0.0
        %651 = vmatpush1.msra.mxu0 %v640
        %652 = vmatprep.subr.mxu0 0.0
        %653 = vmatpush1.msra.mxu0 %v639
        %654 = vmatprep.subr.mxu0 0.0
        %655 = vmatpush1.msra.mxu0 %v638
        %656 = vmatprep.subr.mxu0 0.0
        %657 = vmatpush1.msra.mxu0 %v637
        %658 = vmatprep.subr.mxu0 0.0
        %659 = vmatpush1.msra.mxu0 %v636
        %660 = vmatprep.subr.mxu0 0.0
        %661 = vmatpush1.msra.mxu0 %v635
        %662 = vmatprep.subr.mxu0 0.0
        %663 = vmatpush1.msra.mxu0 %v634
        %664 = vmatprep.subr.mxu0 0.0
        %665 = vmatpush1.msra.mxu0 %v633
        %666 = vmatprep.subr.mxu0 0.0
        %667 = vmatpush1.msra.mxu0 %v632
        %668 = vmatprep.subr.mxu0 0.0
        %669 = vmatpush1.msra.mxu0 %v631
        %670 = vmatprep.subr.mxu0 0.0
        %671 = vmatpush1.msra.mxu0 %v630
        %672 = vmatprep.subr.mxu0 0.0
        %673 = vmatpush1.msra.mxu0 %v629
        %674 = vmatprep.subr.mxu0 0.0
        %675 = vmatpush1.msra.mxu0 %v628
        %676 = vmatprep.subr.mxu0 0.0
        %677 = vmatpush2.msra.mxu0 0.0
        %678 = vmatprep.subr.mxu0 0.0
        %679 = vmatpush2.msra.mxu0 0.0
        %680 = vmatprep.subr.mxu0 0.0
        %681 = vmatpush2.msra.mxu0 0.0
        %682 = vmatprep.subr.mxu0 0.0
        %683 = vmatpush2.msra.mxu0 0.0
        %684 = vmatprep.subr.mxu0 0.0
        %685 = vmatpush2.msra.mxu0 0.0
        %686 = vmatprep.subr.mxu0 0.0
        %687 = vmatpush2.msra.mxu0 0.0
        %688 = vmatprep.subr.mxu0 0.0
        %689 = vmatpush2.msra.mxu0 0.0
        %690 = vmatprep.subr.mxu0 0.0
        %691 = vmatpush2.msra.mxu0 0.0
        %692 = vmatprep.subr.mxu0 0.0
        %693 = vmatpush2.msra.mxu0 0.0
        %694 = vmatprep.subr.mxu0 0.0
        %695 = vmatpush2.msra.mxu0 0.0
        %696 = vmatprep.subr.mxu0 0.0
        %697 = vmatpush2.msra.mxu0 0.0
        %698 = vmatprep.subr.mxu0 0.0
        %699 = vmatpush2.msra.mxu0 0.0
        %700 = vmatprep.subr.mxu0 0.0
        %701 = vmatpush2.msra.mxu0 0.0
        %702 = vmatprep.subr.mxu0 0.0
        %703 = vmatpush2.msra.mxu0 0.0
        %704 = vmatprep.subr.mxu0 0.0
        %705 = vmatpush2.msra.mxu0 0.0
        %706 = vmatprep.subr.mxu0 0.0
        %707 = vmatpush2.msra.mxu0 0.0
        %708 = vmatprep.mubr.f32.mxu0 0.0
        %709 = vmatmul.mubr.f32.gmra.mxu0 %v622
        %v710 = vpop.f32.mrf.mxu0
        %v711 = vadd.f32 0.0, %v710
        %v712 = vpop.f32.mrf.mxu0
        %713 = vmatprep.mubr.f32.mxu0 0.0
        %714 = vmatmul.mubr.f32.gmra.mxu0 %v623
        %v715 = vpop.f32.mrf.mxu0
        %v716 = vadd.f32 0.0, %v715
        %v717 = vpop.f32.mrf.mxu0
        %718 = vdwg.mxu0
        %v719 = vmax.f32 %v625, 1e-16
        %v720 = vmax.f32 %v627, 1e-16
        %v721 = vrcp.pop %v719
        %v722 = vrcp.pop %v720
        %v723 = vmul.f32 %v719, %v721
        %v724 = vmul.f32 %v720, %v722
        %v725 = vsub.f32 2.0, %v723
        %v726 = vsub.f32 2.0, %v724
        %v727 = vmul.f32 %v721, %v725
        %v728 = vmul.f32 %v722, %v726
        %v729 = vmul.f32 %v711, %v727
        %v730 = vmul.f32 %v716, %v728
        %v731 = vld [vmem:[#allocation5] sm:$0xff]
        %v732 = vld [vmem:[#allocation5 + $0x8] sm:$0xff]
        %v733 = vld [vmem:[#allocation5 + $0x10] sm:$0xff]
        %v734 = vld [vmem:[#allocation5 + $0x18] sm:$0xff]
        %v735 = vld [vmem:[#allocation5 + $0x20] sm:$0xff]
        %v736 = vld [vmem:[#allocation5 + $0x28] sm:$0xff]
        %v737 = vld [vmem:[#allocation5 + $0x30] sm:$0xff]
        %v738 = vld [vmem:[#allocation5 + $0x38] sm:$0xff]
        %v739 = vld [vmem:[#allocation5 + $0x40] sm:$0xff]
        %v740 = vld [vmem:[#allocation5 + $0x48] sm:$0xff]
        %v741 = vld [vmem:[#allocation5 + $0x50] sm:$0xff]
        %v742 = vld [vmem:[#allocation5 + $0x58] sm:$0xff]
        %v743 = vld [vmem:[#allocation5 + $0x60] sm:$0xff]
        %v744 = vld [vmem:[#allocation5 + $0x68] sm:$0xff]
        %v745 = vld [vmem:[#allocation5 + $0x70] sm:$0xff]
        %v746 = vld [vmem:[#allocation5 + $0x78] sm:$0xff]
        %v747 = vld [vmem:[%s445] sm:$0xff]
        %v748 = vld [vmem:[%s445 + $0x8] sm:$0xff]
        %v749 = vld [vmem:[#allocation7] sm:$0xff]
        %v750 = vld [vmem:[#allocation7 + $0x8] sm:$0xff]
        %v751 = vld [vmem:[#allocation7 + $0x10] sm:$0xff]
        %v752 = vld [vmem:[#allocation7 + $0x18] sm:$0xff]
        %v753 = vld [vmem:[#allocation7 + $0x20] sm:$0xff]
        %v754 = vld [vmem:[#allocation7 + $0x28] sm:$0xff]
        %v755 = vld [vmem:[#allocation7 + $0x30] sm:$0xff]
        %v756 = vld [vmem:[#allocation7 + $0x38] sm:$0xff]
        %v757 = vld [vmem:[#allocation7 + $0x40] sm:$0xff]
        %v758 = vld [vmem:[#allocation7 + $0x48] sm:$0xff]
        %v759 = vld [vmem:[#allocation7 + $0x50] sm:$0xff]
        %v760 = vld [vmem:[#allocation7 + $0x58] sm:$0xff]
        %v761 = vld [vmem:[#allocation7 + $0x60] sm:$0xff]
        %v762 = vld [vmem:[#allocation7 + $0x68] sm:$0xff]
        %v763 = vld [vmem:[#allocation7 + $0x70] sm:$0xff]
        %v764 = vld [vmem:[#allocation7 + $0x78] sm:$0xff]
        %765 = vmatprep.subr.mxu0 0.0
        %766 = vmatpush1.msra.mxu0 %v764
        %767 = vmatprep.subr.mxu0 0.0
        %768 = vmatpush1.msra.mxu0 %v763
        %769 = vmatprep.subr.mxu0 0.0
        %770 = vmatpush1.msra.mxu0 %v762
        %771 = vmatprep.subr.mxu0 0.0
        %772 = vmatpush1.msra.mxu0 %v761
        %773 = vmatprep.subr.mxu0 0.0
        %774 = vmatpush1.msra.mxu0 %v760
        %775 = vmatprep.subr.mxu0 0.0
        %776 = vmatpush1.msra.mxu0 %v759
        %777 = vmatprep.subr.mxu0 0.0
        %778 = vmatpush1.msra.mxu0 %v758
        %779 = vmatprep.subr.mxu0 0.0
        %780 = vmatpush1.msra.mxu0 %v757
        %781 = vmatprep.subr.mxu0 0.0
        %782 = vmatpush1.msra.mxu0 %v756
        %783 = vmatprep.subr.mxu0 0.0
        %784 = vmatpush1.msra.mxu0 %v755
        %785 = vmatprep.subr.mxu0 0.0
        %786 = vmatpush1.msra.mxu0 %v754
        %787 = vmatprep.subr.mxu0 0.0
        %788 = vmatpush1.msra.mxu0 %v753
        %789 = vmatprep.subr.mxu0 0.0
        %790 = vmatpush1.msra.mxu0 %v752
        %791 = vmatprep.subr.mxu0 0.0
        %792 = vmatpush1.msra.mxu0 %v751
        %793 = vmatprep.subr.mxu0 0.0
        %794 = vmatpush1.msra.mxu0 %v750
        %795 = vmatprep.subr.mxu0 0.0
        %796 = vmatpush1.msra.mxu0 %v749
        %797 = vmatprep.subr.mxu0 0.0
        %798 = vmatpush2.msra.mxu0 0.0
        %799 = vmatprep.subr.mxu0 0.0
        %800 = vmatpush2.msra.mxu0 0.0
        %801 = vmatprep.subr.mxu0 0.0
        %802 = vmatpush2.msra.mxu0 0.0
        %803 = vmatprep.subr.mxu0 0.0
        %804 = vmatpush2.msra.mxu0 0.0
        %805 = vmatprep.subr.mxu0 0.0
        %806 = vmatpush2.msra.mxu0 0.0
        %807 = vmatprep.subr.mxu0 0.0
        %808 = vmatpush2.msra.mxu0 0.0
        %809 = vmatprep.subr.mxu0 0.0
        %810 = vmatpush2.msra.mxu0 0.0
        %811 = vmatprep.subr.mxu0 0.0
        %812 = vmatpush2.msra.mxu0 0.0
        %813 = vmatprep.subr.mxu0 0.0
        %814 = vmatpush2.msra.mxu0 0.0
        %815 = vmatprep.subr.mxu0 0.0
        %816 = vmatpush2.msra.mxu0 0.0
        %817 = vmatprep.subr.mxu0 0.0
        %818 = vmatpush2.msra.mxu0 0.0
        %819 = vmatprep.subr.mxu0 0.0
        %820 = vmatpush2.msra.mxu0 0.0
        %821 = vmatprep.subr.mxu0 0.0
        %822 = vmatpush2.msra.mxu0 0.0
        %823 = vmatprep.subr.mxu0 0.0
        %824 = vmatpush2.msra.mxu0 0.0
        %825 = vmatprep.subr.mxu0 0.0
        %826 = vmatpush2.msra.mxu0 0.0
        %827 = vmatprep.subr.mxu0 0.0
        %828 = vmatpush2.msra.mxu0 0.0
        %829 = vmatprep.mubr.f32.mxu0 0.0
        %830 = vmatmul.mubr.f32.gmra.mxu0 %v747
        %v831 = vpop.f32.mrf.mxu0
        %v832 = vadd.f32 0.0, %v831
        %v833 = vpop.f32.mrf.mxu0
        %834 = vmatprep.mubr.f32.mxu0 0.0
        %835 = vmatmul.mubr.f32.gmra.mxu0 %v748
        %v836 = vpop.f32.mrf.mxu0
        %v837 = vadd.f32 0.0, %v836
        %v838 = vpop.f32.mrf.mxu0
        %839 = vdwg.mxu0
        %840 = vmatprep.subr.mxu0 0.0
        %841 = vmatpush1.msra.mxu0 %v746
        %842 = vmatprep.subr.mxu0 0.0
        %843 = vmatpush1.msra.mxu0 %v745
        %844 = vmatprep.subr.mxu0 0.0
        %845 = vmatpush1.msra.mxu0 %v744
        %846 = vmatprep.subr.mxu0 0.0
        %847 = vmatpush1.msra.mxu0 %v743
        %848 = vmatprep.subr.mxu0 0.0
        %849 = vmatpush1.msra.mxu0 %v742
        %850 = vmatprep.subr.mxu0 0.0
        %851 = vmatpush1.msra.mxu0 %v741
        %852 = vmatprep.subr.mxu0 0.0
        %853 = vmatpush1.msra.mxu0 %v740
        %854 = vmatprep.subr.mxu0 0.0
        %855 = vmatpush1.msra.mxu0 %v739
        %856 = vmatprep.subr.mxu0 0.0
        %857 = vmatpush1.msra.mxu0 %v738
        %858 = vmatprep.subr.mxu0 0.0
        %859 = vmatpush1.msra.mxu0 %v737
        %860 = vmatprep.subr.mxu0 0.0
        %861 = vmatpush1.msra.mxu0 %v736
        %862 = vmatprep.subr.mxu0 0.0
        %863 = vmatpush1.msra.mxu0 %v735
        %864 = vmatprep.subr.mxu0 0.0
        %865 = vmatpush1.msra.mxu0 %v734
        %866 = vmatprep.subr.mxu0 0.0
        %867 = vmatpush1.msra.mxu0 %v733
        %868 = vmatprep.subr.mxu0 0.0
        %869 = vmatpush1.msra.mxu0 %v732
        %870 = vmatprep.subr.mxu0 0.0
        %871 = vmatpush1.msra.mxu0 %v731
        %872 = vmatprep.subr.mxu0 0.0
        %873 = vmatpush2.msra.mxu0 0.0
        %874 = vmatprep.subr.mxu0 0.0
        %875 = vmatpush2.msra.mxu0 0.0
        %876 = vmatprep.subr.mxu0 0.0
        %877 = vmatpush2.msra.mxu0 0.0
        %878 = vmatprep.subr.mxu0 0.0
        %879 = vmatpush2.msra.mxu0 0.0
        %880 = vmatprep.subr.mxu0 0.0
        %881 = vmatpush2.msra.mxu0 0.0
        %882 = vmatprep.subr.mxu0 0.0
        %883 = vmatpush2.msra.mxu0 0.0
        %884 = vmatprep.subr.mxu0 0.0
        %885 = vmatpush2.msra.mxu0 0.0
        %886 = vmatprep.subr.mxu0 0.0
        %887 = vmatpush2.msra.mxu0 0.0
        %888 = vmatprep.subr.mxu0 0.0
        %889 = vmatpush2.msra.mxu0 0.0
        %890 = vmatprep.subr.mxu0 0.0
        %891 = vmatpush2.msra.mxu0 0.0
        %892 = vmatprep.subr.mxu0 0.0
        %893 = vmatpush2.msra.mxu0 0.0
        %894 = vmatprep.subr.mxu0 0.0
        %895 = vmatpush2.msra.mxu0 0.0
        %896 = vmatprep.subr.mxu0 0.0
        %897 = vmatpush2.msra.mxu0 0.0
        %898 = vmatprep.subr.mxu0 0.0
        %899 = vmatpush2.msra.mxu0 0.0
        %900 = vmatprep.subr.mxu0 0.0
        %901 = vmatpush2.msra.mxu0 0.0
        %902 = vmatprep.subr.mxu0 0.0
        %903 = vmatpush2.msra.mxu0 0.0
        %904 = vmatprep.mubr.f32.mxu0 0.0
        %905 = vmatmul.mubr.f32.gmra.mxu0 %v729
        %v906 = vpop.f32.mrf.mxu0
        %v907 = vadd.f32 %v832, %v906
        %v908 = vpop.f32.mrf.mxu0
        %909 = vmatprep.mubr.f32.mxu0 0.0
        %910 = vmatmul.mubr.f32.gmra.mxu0 %v730
        %v911 = vpop.f32.mrf.mxu0
        %v912 = vadd.f32 %v837, %v911
        %v913 = vpop.f32.mrf.mxu0
        %914 = vdwg.mxu0
        %v915 = vld [vmem:[%s8] sm:$0x1]
        %v917 = vlaneseq
        %v918 = vshrl.u32 %v917, 7
        %v919 = vsub.s32 0, %v918
        %v920 = vrot.slane %v915, %v919
        %v922 = vadd.f32 %v907, %v920
        %v923 = vadd.f32 %v912, %v920
        %v924 = vmax.f32 %v922, 0.0
        %v925 = vmax.f32 %v923, 0.0
        %s926 = smul.u32 %s30, 16
        %v927 = vlaneseq
        %v928 = vshrl.u32 %v927, 7
        %v929 = vadd.s32 %v928, 8
        %v930 = vstv %s926
        %v931 = vadd.s32 %v928, %v930
        %v932 = vadd.s32 %v929, %v930
        %vm933 = vcmp.lt.s32.totalorder %v931, 32
        %vm934 = vcmp.lt.s32.totalorder %v932, 32
        %v935 = vsel %vm933, 1, 0
        %v936 = vsel %vm934, 1, 0
        %v937 = vcvt.s32.f32 %v935
        %v938 = vcvt.s32.f32 %v936
        %v939 = vmul.f32 %v924, %v937
        %v940 = vmul.f32 %v925, %v938
        %941 = vst [vmem:[%s433] sm:$0xff] %v939
        %942 = vst [vmem:[%s433 + $0x8] sm:$0xff] %v940
        %v943 = vadd.f32 %v939, %v940
        %v944 = vrot.slane %v943, 4
        %v945 = vadd.f32 %v943, %v944
        %v946 = vrot.slane %v945, 2
        %v947 = vadd.f32 %v945, %v946
        %v948 = vrot.slane %v947, 1
        %v949 = vadd.f32 %v947, %v948
        %v950 = vmul.f32 %v939, %v939
        %v951 = vmul.f32 %v940, %v940
        %v952 = vadd.f32 %v950, %v951
        %v953 = vrot.slane %v952, 4
        %v954 = vadd.f32 %v952, %v953
        %v955 = vrot.slane %v954, 2
        %v956 = vadd.f32 %v954, %v955
        %v957 = vrot.slane %v956, 1
        %v958 = vadd.f32 %v956, %v957
        %vm959 = vcmask 1040384
        %v960 = vsel %vm959, %v949, %v958
        %961 = vst [vmem:[%s440] sm:$0x3] %v960
        %s962 = sand.u32 %s242, 1
        %s963 = scalar_lea.sflag [#allocation4], %s962
        %s964 = sand.u32 %s242, 1
        %s965 = smul.addr %s964, 16
        %s966 = scalar_lea.vmem [#allocation8], %s965
        %s967 = sand.u32 %s268, 1
        %s968 = scalar_lea.sflag [#allocation10], %s967
        %s969 = sand.u32 %s268, 1
        %s970 = smul.addr %s969, 2
        %s971 = scalar_lea.vmem [#allocation9], %s970
        // Predicated region
        $region69: #{tpu_custom_call.1} parent=55 // pred_check
          %p972 = pneg %p252
        $region70: #{tpu_custom_call.1} parent=55 // pred_check_branch
          %974 = sbr.rel (%p972) target = $region72
        $region71: #{tpu_custom_call.1} parent=55 // pred_region
          %s975 = smul.u32 2, %s30
          %s977 = ssub.s32 256, 256
          %978 = vsyncadd %s963, %s977
          %s979 = smul.addr %s975, 128
          %s980 = scalar_lea.hbm %s9, %s979
          %s981 = sshll.u32 %s966, 4
          %s982 = int_to_ptr.vmem [resolvable:$true] %s981
          %987 = dma.vmem_to_hbm [thread:$0]  %s982, 256, %s980, %s963, 128, 128, 8
        $region72: #{tpu_custom_call.1} parent=55 // pred_fallthru
          _
        // Predicated region
        $region73: #{tpu_custom_call.1} parent=55 // pred_check
          %p988 = pneg %p278
        $region74: #{tpu_custom_call.1} parent=55 // pred_check_branch
          %990 = sbr.rel (%p988) target = $region76
        $region75: #{tpu_custom_call.1} parent=55 // pred_region
          %s992 = ssub.s32 32, 32
          %993 = vsyncadd %s968, %s992
          %s994 = smul.addr %s30, 32
          %s995 = scalar_lea.hbm %s10, %s994
          %s997 = sshll.u32 %s971, 4
          %s998 = int_to_ptr.vmem [resolvable:$true] %s997
          %1000 = dma.vmem_to_hbm [thread:$0]  %s998, 32, %s995, %s968
        $region76: #{tpu_custom_call.1} parent=55 // pred_fallthru
          _
      $region56: #{tpu_custom_call.1} parent=5 // pred_fallthru
        _
      %p1001 = scmp.le.s32.totalorder 2, %s25
      // Predicated region
      $region77: #{tpu_custom_call.1} parent=5 // pred_check
        %p1002 = pneg %p1001
      $region78: #{tpu_custom_call.1} parent=5 // pred_check_branch
        %1004 = sbr.rel (%p1002) target = $region80
      $region79: #{tpu_custom_call.1} parent=5 // pred_region
        %s1005 = ssub.s32 %s25, 2
        // Predicated region
        $region81: #{tpu_custom_call.1} parent=79 // pred_check
          %p1006 = pneg %p258
        $region82: #{tpu_custom_call.1} parent=79 // pred_check_branch
          %1008 = sbr.rel (%p1006) target = $region84
        $region83: #{tpu_custom_call.1} parent=79 // pred_region
          %s1009 = sand.u32 %s243, 1
          %s1010 = scalar_lea.sflag [#allocation4], %s1009
          %s1011 = sand.u32 %s243, 1
          %s1012 = smul.addr %s1011, 16
          %s1013 = scalar_lea.vmem [#allocation8], %s1012
          %1014 = dma.done %s1010, 256
        $region84: #{tpu_custom_call.1} parent=79 // pred_fallthru
          _
        // Predicated region
        $region85: #{tpu_custom_call.1} parent=79 // pred_check
          %p1015 = pneg %p284
        $region86: #{tpu_custom_call.1} parent=79 // pred_check_branch
          %1017 = sbr.rel (%p1015) target = $region88
        $region87: #{tpu_custom_call.1} parent=79 // pred_region
          %s1018 = sand.u32 %s269, 1
          %s1019 = scalar_lea.sflag [#allocation10], %s1018
          %s1020 = sand.u32 %s269, 1
          %s1021 = smul.addr %s1020, 2
          %s1022 = scalar_lea.vmem [#allocation9], %s1021
          %1023 = dma.done %s1019, 32
        $region88: #{tpu_custom_call.1} parent=79 // pred_fallthru
          _
      $region80: #{tpu_custom_call.1} parent=5 // pred_fallthru
        _
    $region6: #{tpu_custom_call.1} parent=1 // loop_footer
      %s29 = sadd.s32 1, %s25
    $region7: #{tpu_custom_call.1} parent=1 // loop_footer_branch
      %24 = sbr.rel target = $region3
    $region8: #{tpu_custom_call.1} parent=1 // loop_exit
      _
    %1024 = vsyncpa [#allocation3], 1
    %s1025 = scalar_lea.sflag [#allocation3], 1
    %1026 = vsyncpa %s1025, 1
    %1027 = vsyncpa [#allocation6], 1
    %1028 = vsyncpa [#allocation4], 1
    %s1029 = scalar_lea.sflag [#allocation4], 1
    %1030 = vsyncpa %s1029, 1
    %1031 = vsyncpa [#allocation10], 1
    %s1032 = scalar_lea.sflag [#allocation10], 1
    %1033 = vsyncpa %s1032, 1

</llo_original>
